<compile_context>
chip_gen: v7x
topology: tpu7x:2x2x1
jax: 0.10.0
libtpu: 0.0.40
codegen_flags: <defaults>
</compile_context>

<pallas_src>
import functools

import jax
import jax.numpy as jnp
from jax.experimental import pallas as pl
from jax.experimental.pallas import tpu as pltpu


# ----------------------------------------------------------------------------
# Fused kernel: all LSTM layers + final Linear, wavefront schedule
# ----------------------------------------------------------------------------
def _fused_lstm_kernel(x_ref, wih0_ref, wrec_ref, bias_ref, lin_w_ref,
                       lin_b_ref, out_ref, *, n_layers, seq_len, batch,
                       batch_pad, hidden):
    """Fused multi-layer LSTM + Linear.

    x_ref     : (T*Bp, F)   bf16  time-major, batch zero-padded to Bp rows
    wih0_ref  : (F, 4H)     bf16  layer-0 input projection (transposed)
    wrec_ref  : (L*H, L*4H) bf16  fused recurrent weight:
                  rows [l*H:(l+1)*H],  cols [l*4H:(l+1)*4H] = Whh_l^T
                  rows [(l-1)*H:l*H],  cols [l*4H:(l+1)*4H] = Wih_l^T (l>=1)
    bias_ref  : (1, L*4H)   f32   (b_ih_l + b_hh_l) per layer block
    lin_w_ref : (H, C)      bf16
    lin_b_ref : (1, C)      f32
    out_ref   : (B, C)      f32
    """
    T, L, H, Bp = seq_len, n_layers, hidden, batch_pad
    G = 4 * H

    # Layer-0 input projection for ALL timesteps: one batched MXU matmul
    # (M = T*Bp), off the serial recurrence.  Bias lives in bias_ref.
    gin = jnp.dot(x_ref[...], wih0_ref[...],
                  preferred_element_type=jnp.float32)            # (T*Bp, 4H)

    wrec = wrec_ref[...]                                         # (L*H, L*4H)
    bias = bias_ref[...]                                         # (1, L*4H)

    h = [jnp.zeros((Bp, H), jnp.float32) for _ in range(L)]
    c = [jnp.zeros((Bp, H), jnp.float32) for _ in range(L)]

    # Wavefront: at wave s, layer l processes t = s - l.  Each wave's
    # h_l @ Whh_l and h_{l-1} @ Wih_l terms (all active layers) are one
    # fused MXU push.  T is small, so the wave loop is fully unrolled with
    # static indices.
    # TODO(synk): for long T switch to lax.fori_loop carrying (h, c) and
    # chunk `gin` over T*Bp to bound VMEM (matters first on v7x's 64 MiB).
    for s in range(T + L - 1):
        lhs = jnp.concatenate(h, axis=-1).astype(jnp.bfloat16)       # (Bp, L*H)
        acts = jnp.dot(lhs, wrec,
                       preferred_element_type=jnp.float32) + bias    # (Bp, L*4H)
        for l in range(L):
            t = s - l
            if t < 0 or t >= T:      # layer inactive at this wave (static)
                continue
            g = acts[:, l * G:(l + 1) * G]                            # (Bp, 4H)
            if l == 0:
                g = g + gin[s * Bp:(s + 1) * Bp, :]   # 8-row aligned slice
            # PyTorch gate order: i, f, g, o.  One sigmoid pass over the whole
            # 4H block covers i/f/o; the g gate and c get their own tanh.
            sg = jax.nn.sigmoid(g)
            i_g = sg[:, 0 * H:1 * H]
            f_g = sg[:, 1 * H:2 * H]
            o_g = sg[:, 3 * H:4 * H]
            g_g = jnp.tanh(g[:, 2 * H:3 * H])
            c[l] = f_g * c[l] + i_g * g_g
            h[l] = o_g * jnp.tanh(c[l])

    # Final Linear on the last layer's hidden state at t = T-1; drop pad rows.
    logits = (jnp.dot(h[L - 1].astype(jnp.bfloat16), lin_w_ref[...],
                      preferred_element_type=jnp.float32)
              + lin_b_ref[...])                                       # (Bp, C)
    out_ref[...] = logits[:batch, :].astype(out_ref.dtype)


# ----------------------------------------------------------------------------
# Wrapper
# ----------------------------------------------------------------------------
def lstm_glove_classifier(packed, x, *, hidden_size, n_layers):
    """Forward pass. x: (batch, seq, feats) f32 -> (batch, n_classes) f32."""
    B, T, F = x.shape
    H, L = hidden_size, n_layers
    C = packed["lin_w_t"].shape[1]
    Bp = max(8, -(-B // 8) * 8)          # pad batch to a sublane multiple

    # batch_first -> time-major, zero-pad batch, flatten, bf16 for the MXU.
    xt = jnp.transpose(x, (1, 0, 2))                  # (T, B, F)
    if Bp != B:
        xt = jnp.pad(xt, ((0, 0), (0, Bp - B), (0, 0)))
    x2d = xt.reshape(T * Bp, F).astype(jnp.bfloat16)

    kernel = functools.partial(_fused_lstm_kernel, n_layers=L, seq_len=T,
                               batch=B, batch_pad=Bp, hidden=H)
    vmem = pl.BlockSpec(memory_space=pltpu.MemorySpace.VMEM)
    # Grid-less: all operands fit comfortably in VMEM at these shapes.
    # TODO(synk): for B >> 8, add a batch grid axis with
    # dimension_semantics=("parallel",) so v7x's second TensorCore is used.
    return pl.pallas_call(
        kernel,
        out_shape=jax.ShapeDtypeStruct((B, C), jnp.float32),
        in_specs=[vmem] * 6,
        out_specs=vmem,
    )(x2d, packed["wih0_t"], packed["w_rec"], packed["b_fused"],
      packed["lin_w_t"], packed["lin_b"])


# ----------------------------------------------------------------------------
# Parameter init (nn.LSTM / nn.Linear layout, pre-transposed) + one-time pack
# ----------------------------------------------------------------------------
def init_params(key, feats_per_time_step, hidden_size, n_layers, n_classes):
    """w_ih_t: (in, 4H), w_hh_t: (H, 4H), bias: (1, 4H) (= b_ih + b_hh),
    lin_w_t: (H, C), lin_b: (1, C). All f32 (reference precision)."""
    H = hidden_size
    scale = 1.0 / jnp.sqrt(jnp.float32(H))
    params = {"layers": []}
    for layer in range(n_layers):
        in_size = feats_per_time_step if layer == 0 else H
        key, k1, k2, k3, k4 = jax.random.split(key, 5)
        w_ih_t = jax.random.uniform(k1, (in_size, 4 * H), jnp.float32,
                                    -scale, scale)
        w_hh_t = jax.random.uniform(k2, (H, 4 * H), jnp.float32, -scale, scale)
        b_ih = jax.random.uniform(k3, (4 * H,), jnp.float32, -scale, scale)
        b_hh = jax.random.uniform(k4, (4 * H,), jnp.float32, -scale, scale)
        params["layers"].append(
            {"w_ih_t": w_ih_t, "w_hh_t": w_hh_t,
             "bias": (b_ih + b_hh).reshape(1, 4 * H)})
    key, k5, k6 = jax.random.split(key, 3)
    params["lin_w_t"] = jax.random.uniform(k5, (hidden_size, n_classes),
                                           jnp.float32, -scale, scale)
    params["lin_b"] = jax.random.uniform(k6, (1, n_classes), jnp.float32,
                                         -scale, scale)
    return params


def pack_params(params, hidden_size, n_layers):
    """Build the fused bf16 kernel operands ONCE (no per-forward casts)."""
    H, L = hidden_size, n_layers
    G = 4 * H
    w_rec = jnp.zeros((L * H, L * G), jnp.float32)
    biases = []
    for l, lp in enumerate(params["layers"]):
        w_rec = w_rec.at[l * H:(l + 1) * H, l * G:(l + 1) * G].set(lp["w_hh_t"])
        if l >= 1:
            w_rec = w_rec.at[(l - 1) * H:l * H,
                             l * G:(l + 1) * G].set(lp["w_ih_t"])
        biases.append(lp["bias"])
    return {
        "wih0_t": params["layers"][0]["w_ih_t"].astype(jnp.bfloat16),
        "w_rec": w_rec.astype(jnp.bfloat16),
        "b_fused": jnp.concatenate(biases, axis=-1),           # (1, L*4H) f32
        "lin_w_t": params["lin_w_t"].astype(jnp.bfloat16),
        "lin_b": params["lin_b"],
    }


# ----------------------------------------------------------------------------
# Pure-JAX reference with matching numerics (bf16 MXU inputs, f32 state)
# ----------------------------------------------------------------------------
def _reference(params, x, hidden_size):
    H = hidden_size
    B = x.shape[0]
    seq = jnp.transpose(x, (1, 0, 2)).astype(jnp.float32)      # (T, B, F)
    for lp in params["layers"]:
        wih = lp["w_ih_t"].astype(jnp.bfloat16)
        whh = lp["w_hh_t"].astype(jnp.bfloat16)
        b = lp["bias"]

        def step(carry, x_t, wih=wih, whh=whh, b=b):
            h, c = carry
            gates = (jnp.dot(x_t.astype(jnp.bfloat16), wih,
                             preferred_element_type=jnp.float32)
                     + jnp.dot(h.astype(jnp.bfloat16), whh,
                               preferred_element_type=jnp.float32)
                     + b)
            i = jax.nn.sigmoid(gates[:, 0 * H:1 * H])
            f = jax.nn.sigmoid(gates[:, 1 * H:2 * H])
            g = jnp.tanh(gates[:, 2 * H:3 * H])
            o = jax.nn.sigmoid(gates[:, 3 * H:4 * H])
            c = f * c + i * g
            h = o * jnp.tanh(c)
            return (h, c), h

        init = (jnp.zeros((B, H), jnp.float32), jnp.zeros((B, H), jnp.float32))
        _, seq = jax.lax.scan(step, init, seq)
    last = seq[-1]
    return (jnp.dot(last.astype(jnp.bfloat16),
                    params["lin_w_t"].astype(jnp.bfloat16),
                    preferred_element_type=jnp.float32)
            + params["lin_b"])


if __name__ == "__main__":
    batch, seq_len = 2, 8
    feats_per_time_step = 32   # embedding size (GloVe dim)
    hidden_size = 32
    n_layers = 2
    n_classes = 2

    key = jax.random.PRNGKey(0)
    key, kx, kp = jax.random.split(key, 3)
    x = jax.random.normal(kx, (batch, seq_len, feats_per_time_step),
                          dtype=jnp.float32)
    params = init_params(kp, feats_per_time_step, hidden_size, n_layers,
                         n_classes)
    packed = pack_params(params, hidden_size, n_layers)   # one-time bf16 pack

    fwd = jax.jit(functools.partial(lstm_glove_classifier,
                                    hidden_size=hidden_size,
                                    n_layers=n_layers))
    out = jax.block_until_ready(fwd(packed, x))
    ref = jax.block_until_ready(_reference(params, x, hidden_size))

    assert out.shape == (batch, n_classes)
    assert jnp.allclose(out, ref, rtol=1e-3, atol=2e-3), (out, ref)

    print("KERNEL_OK")
</pallas_src>

<mosaic_0001>
module attributes {stable_mosaic.version = 11 : i64} {
  func.func @_fused_lstm_kernel(%arg0: memref<64x32xbf16, #tpu.memory_space<vmem>>, %arg1: memref<32x128xbf16, #tpu.memory_space<vmem>>, %arg2: memref<64x256xbf16, #tpu.memory_space<vmem>>, %arg3: memref<1x256xf32, #tpu.memory_space<vmem>>, %arg4: memref<32x2xbf16, #tpu.memory_space<vmem>>, %arg5: memref<1x2xf32, #tpu.memory_space<vmem>>, %arg6: memref<2x2xf32, #tpu.memory_space<vmem>>) attributes {dimension_semantics = [], scalar_prefetch = 0 : i64, scratch_operands = 0 : i64, tpu.core_type = #tpu.core_type<tc>} {
    %c0 = arith.constant 0 : index
    %c0_0 = arith.constant 0 : index
    %0 = vector.load %arg0[%c0, %c0_0] : memref<64x32xbf16, #tpu.memory_space<vmem>>, vector<64x32xbf16>
    %c0_1 = arith.constant 0 : index
    %c0_2 = arith.constant 0 : index
    %1 = vector.load %arg1[%c0_1, %c0_2] : memref<32x128xbf16, #tpu.memory_space<vmem>>, vector<32x128xbf16>
    %cst = arith.constant dense<0.000000e+00> : vector<64x128xf32>
    %2 = tpu.matmul %0, %1, %cst {dimension_numbers = #tpu.dot_dimension_numbers<[1], [0], [0], [1], [0, 0, 1, 1], [], []>} : vector<64x32xbf16>, vector<32x128xbf16>, vector<64x128xf32> -> vector<64x128xf32>
    %c0_3 = arith.constant 0 : index
    %c0_4 = arith.constant 0 : index
    %3 = vector.load %arg2[%c0_3, %c0_4] : memref<64x256xbf16, #tpu.memory_space<vmem>>, vector<64x256xbf16>
    %c0_5 = arith.constant 0 : index
    %c0_6 = arith.constant 0 : index
    %4 = vector.load %arg3[%c0_5, %c0_6] : memref<1x256xf32, #tpu.memory_space<vmem>>, vector<1x256xf32>
    %cst_7 = arith.constant 0.000000e+00 : f32
    %5 = vector.broadcast %cst_7 : f32 to vector<8x32xf32>
    %cst_8 = arith.constant 0.000000e+00 : f32
    %6 = vector.broadcast %cst_8 : f32 to vector<8x32xf32>
    %cst_9 = arith.constant 0.000000e+00 : f32
    %7 = vector.broadcast %cst_9 : f32 to vector<8x32xf32>
    %cst_10 = arith.constant 0.000000e+00 : f32
    %8 = vector.broadcast %cst_10 : f32 to vector<8x32xf32>
    %9 = tpu.concatenate %5, %6 in 1 : vector<8x32xf32>, vector<8x32xf32> -> vector<8x64xf32>
    %10 = arith.truncf %9 : vector<8x64xf32> to vector<8x64xbf16>
    %cst_11 = arith.constant dense<0.000000e+00> : vector<8x256xf32>
    %11 = tpu.matmul %10, %3, %cst_11 {dimension_numbers = #tpu.dot_dimension_numbers<[1], [0], [0], [1], [0, 0, 1, 1], [], []>} : vector<8x64xbf16>, vector<64x256xbf16>, vector<8x256xf32> -> vector<8x256xf32>
    %12 = vector.broadcast %4 : vector<1x256xf32> to vector<8x256xf32>
    %13 = arith.addf %11, %12 : vector<8x256xf32>
    %14 = vector.extract_strided_slice %13 {offsets = [0, 0], sizes = [8, 128], strides = [1, 1]} : vector<8x256xf32> to vector<8x128xf32>
    %15 = vector.extract_strided_slice %2 {offsets = [0, 0], sizes = [8, 128], strides = [1, 1]} : vector<64x128xf32> to vector<8x128xf32>
    %16 = arith.addf %14, %15 : vector<8x128xf32>
    %17 = arith.negf %16 : vector<8x128xf32>
    %18 = math.exp %17 : vector<8x128xf32>
    %cst_12 = arith.constant 1.000000e+00 : f32
    %19 = vector.broadcast %cst_12 : f32 to vector<8x128xf32>
    %20 = arith.addf %19, %18 : vector<8x128xf32>
    %21 = arith.divf %19, %20 : vector<8x128xf32>
    %22 = vector.extract_strided_slice %21 {offsets = [0, 0], sizes = [8, 32], strides = [1, 1]} : vector<8x128xf32> to vector<8x32xf32>
    %23 = vector.extract_strided_slice %21 {offsets = [0, 32], sizes = [8, 32], strides = [1, 1]} : vector<8x128xf32> to vector<8x32xf32>
    %24 = vector.extract_strided_slice %21 {offsets = [0, 96], sizes = [8, 32], strides = [1, 1]} : vector<8x128xf32> to vector<8x32xf32>
    %25 = vector.extract_strided_slice %16 {offsets = [0, 64], sizes = [8, 32], strides = [1, 1]} : vector<8x128xf32> to vector<8x32xf32>
    %26 = math.tanh %25 : vector<8x32xf32>
    %27 = arith.mulf %23, %7 : vector<8x32xf32>
    %28 = arith.mulf %22, %26 : vector<8x32xf32>
    %29 = arith.addf %27, %28 : vector<8x32xf32>
    %30 = math.tanh %29 : vector<8x32xf32>
    %31 = arith.mulf %24, %30 : vector<8x32xf32>
    %32 = tpu.concatenate %31, %6 in 1 : vector<8x32xf32>, vector<8x32xf32> -> vector<8x64xf32>
    %33 = arith.truncf %32 : vector<8x64xf32> to vector<8x64xbf16>
    %cst_13 = arith.constant dense<0.000000e+00> : vector<8x256xf32>
    %34 = tpu.matmul %33, %3, %cst_13 {dimension_numbers = #tpu.dot_dimension_numbers<[1], [0], [0], [1], [0, 0, 1, 1], [], []>} : vector<8x64xbf16>, vector<64x256xbf16>, vector<8x256xf32> -> vector<8x256xf32>
    %35 = vector.broadcast %4 : vector<1x256xf32> to vector<8x256xf32>
    %36 = arith.addf %34, %35 : vector<8x256xf32>
    %37 = vector.extract_strided_slice %36 {offsets = [0, 0], sizes = [8, 128], strides = [1, 1]} : vector<8x256xf32> to vector<8x128xf32>
    %38 = vector.extract_strided_slice %2 {offsets = [8, 0], sizes = [8, 128], strides = [1, 1]} : vector<64x128xf32> to vector<8x128xf32>
    %39 = arith.addf %37, %38 : vector<8x128xf32>
    %40 = arith.negf %39 : vector<8x128xf32>
    %41 = math.exp %40 : vector<8x128xf32>
    %cst_14 = arith.constant 1.000000e+00 : f32
    %42 = vector.broadcast %cst_14 : f32 to vector<8x128xf32>
    %43 = arith.addf %42, %41 : vector<8x128xf32>
    %44 = arith.divf %42, %43 : vector<8x128xf32>
    %45 = vector.extract_strided_slice %44 {offsets = [0, 0], sizes = [8, 32], strides = [1, 1]} : vector<8x128xf32> to vector<8x32xf32>
    %46 = vector.extract_strided_slice %44 {offsets = [0, 32], sizes = [8, 32], strides = [1, 1]} : vector<8x128xf32> to vector<8x32xf32>
    %47 = vector.extract_strided_slice %44 {offsets = [0, 96], sizes = [8, 32], strides = [1, 1]} : vector<8x128xf32> to vector<8x32xf32>
    %48 = vector.extract_strided_slice %39 {offsets = [0, 64], sizes = [8, 32], strides = [1, 1]} : vector<8x128xf32> to vector<8x32xf32>
    %49 = math.tanh %48 : vector<8x32xf32>
    %50 = arith.mulf %46, %29 : vector<8x32xf32>
    %51 = arith.mulf %45, %49 : vector<8x32xf32>
    %52 = arith.addf %50, %51 : vector<8x32xf32>
    %53 = math.tanh %52 : vector<8x32xf32>
    %54 = arith.mulf %47, %53 : vector<8x32xf32>
    %55 = vector.extract_strided_slice %36 {offsets = [0, 128], sizes = [8, 128], strides = [1, 1]} : vector<8x256xf32> to vector<8x128xf32>
    %56 = arith.negf %55 : vector<8x128xf32>
    %57 = math.exp %56 : vector<8x128xf32>
    %cst_15 = arith.constant 1.000000e+00 : f32
    %58 = vector.broadcast %cst_15 : f32 to vector<8x128xf32>
    %59 = arith.addf %58, %57 : vector<8x128xf32>
    %60 = arith.divf %58, %59 : vector<8x128xf32>
    %61 = vector.extract_strided_slice %60 {offsets = [0, 0], sizes = [8, 32], strides = [1, 1]} : vector<8x128xf32> to vector<8x32xf32>
    %62 = vector.extract_strided_slice %60 {offsets = [0, 32], sizes = [8, 32], strides = [1, 1]} : vector<8x128xf32> to vector<8x32xf32>
    %63 = vector.extract_strided_slice %60 {offsets = [0, 96], sizes = [8, 32], strides = [1, 1]} : vector<8x128xf32> to vector<8x32xf32>
    %64 = vector.extract_strided_slice %55 {offsets = [0, 64], sizes = [8, 32], strides = [1, 1]} : vector<8x128xf32> to vector<8x32xf32>
    %65 = math.tanh %64 : vector<8x32xf32>
    %66 = arith.mulf %62, %8 : vector<8x32xf32>
    %67 = arith.mulf %61, %65 : vector<8x32xf32>
    %68 = arith.addf %66, %67 : vector<8x32xf32>
    %69 = math.tanh %68 : vector<8x32xf32>
    %70 = arith.mulf %63, %69 : vector<8x32xf32>
    %71 = tpu.concatenate %54, %70 in 1 : vector<8x32xf32>, vector<8x32xf32> -> vector<8x64xf32>
    %72 = arith.truncf %71 : vector<8x64xf32> to vector<8x64xbf16>
    %cst_16 = arith.constant dense<0.000000e+00> : vector<8x256xf32>
    %73 = tpu.matmul %72, %3, %cst_16 {dimension_numbers = #tpu.dot_dimension_numbers<[1], [0], [0], [1], [0, 0, 1, 1], [], []>} : vector<8x64xbf16>, vector<64x256xbf16>, vector<8x256xf32> -> vector<8x256xf32>
    %74 = vector.broadcast %4 : vector<1x256xf32> to vector<8x256xf32>
    %75 = arith.addf %73, %74 : vector<8x256xf32>
    %76 = vector.extract_strided_slice %75 {offsets = [0, 0], sizes = [8, 128], strides = [1, 1]} : vector<8x256xf32> to vector<8x128xf32>
    %77 = vector.extract_strided_slice %2 {offsets = [16, 0], sizes = [8, 128], strides = [1, 1]} : vector<64x128xf32> to vector<8x128xf32>
    %78 = arith.addf %76, %77 : vector<8x128xf32>
    %79 = arith.negf %78 : vector<8x128xf32>
    %80 = math.exp %79 : vector<8x128xf32>
    %cst_17 = arith.constant 1.000000e+00 : f32
    %81 = vector.broadcast %cst_17 : f32 to vector<8x128xf32>
    %82 = arith.addf %81, %80 : vector<8x128xf32>
    %83 = arith.divf %81, %82 : vector<8x128xf32>
    %84 = vector.extract_strided_slice %83 {offsets = [0, 0], sizes = [8, 32], strides = [1, 1]} : vector<8x128xf32> to vector<8x32xf32>
    %85 = vector.extract_strided_slice %83 {offsets = [0, 32], sizes = [8, 32], strides = [1, 1]} : vector<8x128xf32> to vector<8x32xf32>
    %86 = vector.extract_strided_slice %83 {offsets = [0, 96], sizes = [8, 32], strides = [1, 1]} : vector<8x128xf32> to vector<8x32xf32>
    %87 = vector.extract_strided_slice %78 {offsets = [0, 64], sizes = [8, 32], strides = [1, 1]} : vector<8x128xf32> to vector<8x32xf32>
    %88 = math.tanh %87 : vector<8x32xf32>
    %89 = arith.mulf %85, %52 : vector<8x32xf32>
    %90 = arith.mulf %84, %88 : vector<8x32xf32>
    %91 = arith.addf %89, %90 : vector<8x32xf32>
    %92 = math.tanh %91 : vector<8x32xf32>
    %93 = arith.mulf %86, %92 : vector<8x32xf32>
    %94 = vector.extract_strided_slice %75 {offsets = [0, 128], sizes = [8, 128], strides = [1, 1]} : vector<8x256xf32> to vector<8x128xf32>
    %95 = arith.negf %94 : vector<8x128xf32>
    %96 = math.exp %95 : vector<8x128xf32>
    %cst_18 = arith.constant 1.000000e+00 : f32
    %97 = vector.broadcast %cst_18 : f32 to vector<8x128xf32>
    %98 = arith.addf %97, %96 : vector<8x128xf32>
    %99 = arith.divf %97, %98 : vector<8x128xf32>
    %100 = vector.extract_strided_slice %99 {offsets = [0, 0], sizes = [8, 32], strides = [1, 1]} : vector<8x128xf32> to vector<8x32xf32>
    %101 = vector.extract_strided_slice %99 {offsets = [0, 32], sizes = [8, 32], strides = [1, 1]} : vector<8x128xf32> to vector<8x32xf32>
    %102 = vector.extract_strided_slice %99 {offsets = [0, 96], sizes = [8, 32], strides = [1, 1]} : vector<8x128xf32> to vector<8x32xf32>
    %103 = vector.extract_strided_slice %94 {offsets = [0, 64], sizes = [8, 32], strides = [1, 1]} : vector<8x128xf32> to vector<8x32xf32>
    %104 = math.tanh %103 : vector<8x32xf32>
    %105 = arith.mulf %101, %68 : vector<8x32xf32>
    %106 = arith.mulf %100, %104 : vector<8x32xf32>
    %107 = arith.addf %105, %106 : vector<8x32xf32>
    %108 = math.tanh %107 : vector<8x32xf32>
    %109 = arith.mulf %102, %108 : vector<8x32xf32>
    %110 = tpu.concatenate %93, %109 in 1 : vector<8x32xf32>, vector<8x32xf32> -> vector<8x64xf32>
    %111 = arith.truncf %110 : vector<8x64xf32> to vector<8x64xbf16>
    %cst_19 = arith.constant dense<0.000000e+00> : vector<8x256xf32>
    %112 = tpu.matmul %111, %3, %cst_19 {dimension_numbers = #tpu.dot_dimension_numbers<[1], [0], [0], [1], [0, 0, 1, 1], [], []>} : vector<8x64xbf16>, vector<64x256xbf16>, vector<8x256xf32> -> vector<8x256xf32>
    %113 = vector.broadcast %4 : vector<1x256xf32> to vector<8x256xf32>
    %114 = arith.addf %112, %113 : vector<8x256xf32>
    %115 = vector.extract_strided_slice %114 {offsets = [0, 0], sizes = [8, 128], strides = [1, 1]} : vector<8x256xf32> to vector<8x128xf32>
    %116 = vector.extract_strided_slice %2 {offsets = [24, 0], sizes = [8, 128], strides = [1, 1]} : vector<64x128xf32> to vector<8x128xf32>
    %117 = arith.addf %115, %116 : vector<8x128xf32>
    %118 = arith.negf %117 : vector<8x128xf32>
    %119 = math.exp %118 : vector<8x128xf32>
    %cst_20 = arith.constant 1.000000e+00 : f32
    %120 = vector.broadcast %cst_20 : f32 to vector<8x128xf32>
    %121 = arith.addf %120, %119 : vector<8x128xf32>
    %122 = arith.divf %120, %121 : vector<8x128xf32>
    %123 = vector.extract_strided_slice %122 {offsets = [0, 0], sizes = [8, 32], strides = [1, 1]} : vector<8x128xf32> to vector<8x32xf32>
    %124 = vector.extract_strided_slice %122 {offsets = [0, 32], sizes = [8, 32], strides = [1, 1]} : vector<8x128xf32> to vector<8x32xf32>
    %125 = vector.extract_strided_slice %122 {offsets = [0, 96], sizes = [8, 32], strides = [1, 1]} : vector<8x128xf32> to vector<8x32xf32>
    %126 = vector.extract_strided_slice %117 {offsets = [0, 64], sizes = [8, 32], strides = [1, 1]} : vector<8x128xf32> to vector<8x32xf32>
    %127 = math.tanh %126 : vector<8x32xf32>
    %128 = arith.mulf %124, %91 : vector<8x32xf32>
    %129 = arith.mulf %123, %127 : vector<8x32xf32>
    %130 = arith.addf %128, %129 : vector<8x32xf32>
    %131 = math.tanh %130 : vector<8x32xf32>
    %132 = arith.mulf %125, %131 : vector<8x32xf32>
    %133 = vector.extract_strided_slice %114 {offsets = [0, 128], sizes = [8, 128], strides = [1, 1]} : vector<8x256xf32> to vector<8x128xf32>
    %134 = arith.negf %133 : vector<8x128xf32>
    %135 = math.exp %134 : vector<8x128xf32>
    %cst_21 = arith.constant 1.000000e+00 : f32
    %136 = vector.broadcast %cst_21 : f32 to vector<8x128xf32>
    %137 = arith.addf %136, %135 : vector<8x128xf32>
    %138 = arith.divf %136, %137 : vector<8x128xf32>
    %139 = vector.extract_strided_slice %138 {offsets = [0, 0], sizes = [8, 32], strides = [1, 1]} : vector<8x128xf32> to vector<8x32xf32>
    %140 = vector.extract_strided_slice %138 {offsets = [0, 32], sizes = [8, 32], strides = [1, 1]} : vector<8x128xf32> to vector<8x32xf32>
    %141 = vector.extract_strided_slice %138 {offsets = [0, 96], sizes = [8, 32], strides = [1, 1]} : vector<8x128xf32> to vector<8x32xf32>
    %142 = vector.extract_strided_slice %133 {offsets = [0, 64], sizes = [8, 32], strides = [1, 1]} : vector<8x128xf32> to vector<8x32xf32>
    %143 = math.tanh %142 : vector<8x32xf32>
    %144 = arith.mulf %140, %107 : vector<8x32xf32>
    %145 = arith.mulf %139, %143 : vector<8x32xf32>
    %146 = arith.addf %144, %145 : vector<8x32xf32>
    %147 = math.tanh %146 : vector<8x32xf32>
    %148 = arith.mulf %141, %147 : vector<8x32xf32>
    %149 = tpu.concatenate %132, %148 in 1 : vector<8x32xf32>, vector<8x32xf32> -> vector<8x64xf32>
    %150 = arith.truncf %149 : vector<8x64xf32> to vector<8x64xbf16>
    %cst_22 = arith.constant dense<0.000000e+00> : vector<8x256xf32>
    %151 = tpu.matmul %150, %3, %cst_22 {dimension_numbers = #tpu.dot_dimension_numbers<[1], [0], [0], [1], [0, 0, 1, 1], [], []>} : vector<8x64xbf16>, vector<64x256xbf16>, vector<8x256xf32> -> vector<8x256xf32>
    %152 = vector.broadcast %4 : vector<1x256xf32> to vector<8x256xf32>
    %153 = arith.addf %151, %152 : vector<8x256xf32>
    %154 = vector.extract_strided_slice %153 {offsets = [0, 0], sizes = [8, 128], strides = [1, 1]} : vector<8x256xf32> to vector<8x128xf32>
    %155 = vector.extract_strided_slice %2 {offsets = [32, 0], sizes = [8, 128], strides = [1, 1]} : vector<64x128xf32> to vector<8x128xf32>
    %156 = arith.addf %154, %155 : vector<8x128xf32>
    %157 = arith.negf %156 : vector<8x128xf32>
    %158 = math.exp %157 : vector<8x128xf32>
    %cst_23 = arith.constant 1.000000e+00 : f32
    %159 = vector.broadcast %cst_23 : f32 to vector<8x128xf32>
    %160 = arith.addf %159, %158 : vector<8x128xf32>
    %161 = arith.divf %159, %160 : vector<8x128xf32>
    %162 = vector.extract_strided_slice %161 {offsets = [0, 0], sizes = [8, 32], strides = [1, 1]} : vector<8x128xf32> to vector<8x32xf32>
    %163 = vector.extract_strided_slice %161 {offsets = [0, 32], sizes = [8, 32], strides = [1, 1]} : vector<8x128xf32> to vector<8x32xf32>
    %164 = vector.extract_strided_slice %161 {offsets = [0, 96], sizes = [8, 32], strides = [1, 1]} : vector<8x128xf32> to vector<8x32xf32>
    %165 = vector.extract_strided_slice %156 {offsets = [0, 64], sizes = [8, 32], strides = [1, 1]} : vector<8x128xf32> to vector<8x32xf32>
    %166 = math.tanh %165 : vector<8x32xf32>
    %167 = arith.mulf %163, %130 : vector<8x32xf32>
    %168 = arith.mulf %162, %166 : vector<8x32xf32>
    %169 = arith.addf %167, %168 : vector<8x32xf32>
    %170 = math.tanh %169 : vector<8x32xf32>
    %171 = arith.mulf %164, %170 : vector<8x32xf32>
    %172 = vector.extract_strided_slice %153 {offsets = [0, 128], sizes = [8, 128], strides = [1, 1]} : vector<8x256xf32> to vector<8x128xf32>
    %173 = arith.negf %172 : vector<8x128xf32>
    %174 = math.exp %173 : vector<8x128xf32>
    %cst_24 = arith.constant 1.000000e+00 : f32
    %175 = vector.broadcast %cst_24 : f32 to vector<8x128xf32>
    %176 = arith.addf %175, %174 : vector<8x128xf32>
    %177 = arith.divf %175, %176 : vector<8x128xf32>
    %178 = vector.extract_strided_slice %177 {offsets = [0, 0], sizes = [8, 32], strides = [1, 1]} : vector<8x128xf32> to vector<8x32xf32>
    %179 = vector.extract_strided_slice %177 {offsets = [0, 32], sizes = [8, 32], strides = [1, 1]} : vector<8x128xf32> to vector<8x32xf32>
    %180 = vector.extract_strided_slice %177 {offsets = [0, 96], sizes = [8, 32], strides = [1, 1]} : vector<8x128xf32> to vector<8x32xf32>
    %181 = vector.extract_strided_slice %172 {offsets = [0, 64], sizes = [8, 32], strides = [1, 1]} : vector<8x128xf32> to vector<8x32xf32>
    %182 = math.tanh %181 : vector<8x32xf32>
    %183 = arith.mulf %179, %146 : vector<8x32xf32>
    %184 = arith.mulf %178, %182 : vector<8x32xf32>
    %185 = arith.addf %183, %184 : vector<8x32xf32>
    %186 = math.tanh %185 : vector<8x32xf32>
    %187 = arith.mulf %180, %186 : vector<8x32xf32>
    %188 = tpu.concatenate %171, %187 in 1 : vector<8x32xf32>, vector<8x32xf32> -> vector<8x64xf32>
    %189 = arith.truncf %188 : vector<8x64xf32> to vector<8x64xbf16>
    %cst_25 = arith.constant dense<0.000000e+00> : vector<8x256xf32>
    %190 = tpu.matmul %189, %3, %cst_25 {dimension_numbers = #tpu.dot_dimension_numbers<[1], [0], [0], [1], [0, 0, 1, 1], [], []>} : vector<8x64xbf16>, vector<64x256xbf16>, vector<8x256xf32> -> vector<8x256xf32>
    %191 = vector.broadcast %4 : vector<1x256xf32> to vector<8x256xf32>
    %192 = arith.addf %190, %191 : vector<8x256xf32>
    %193 = vector.extract_strided_slice %192 {offsets = [0, 0], sizes = [8, 128], strides = [1, 1]} : vector<8x256xf32> to vector<8x128xf32>
    %194 = vector.extract_strided_slice %2 {offsets = [40, 0], sizes = [8, 128], strides = [1, 1]} : vector<64x128xf32> to vector<8x128xf32>
    %195 = arith.addf %193, %194 : vector<8x128xf32>
    %196 = arith.negf %195 : vector<8x128xf32>
    %197 = math.exp %196 : vector<8x128xf32>
    %cst_26 = arith.constant 1.000000e+00 : f32
    %198 = vector.broadcast %cst_26 : f32 to vector<8x128xf32>
    %199 = arith.addf %198, %197 : vector<8x128xf32>
    %200 = arith.divf %198, %199 : vector<8x128xf32>
    %201 = vector.extract_strided_slice %200 {offsets = [0, 0], sizes = [8, 32], strides = [1, 1]} : vector<8x128xf32> to vector<8x32xf32>
    %202 = vector.extract_strided_slice %200 {offsets = [0, 32], sizes = [8, 32], strides = [1, 1]} : vector<8x128xf32> to vector<8x32xf32>
    %203 = vector.extract_strided_slice %200 {offsets = [0, 96], sizes = [8, 32], strides = [1, 1]} : vector<8x128xf32> to vector<8x32xf32>
    %204 = vector.extract_strided_slice %195 {offsets = [0, 64], sizes = [8, 32], strides = [1, 1]} : vector<8x128xf32> to vector<8x32xf32>
    %205 = math.tanh %204 : vector<8x32xf32>
    %206 = arith.mulf %202, %169 : vector<8x32xf32>
    %207 = arith.mulf %201, %205 : vector<8x32xf32>
    %208 = arith.addf %206, %207 : vector<8x32xf32>
    %209 = math.tanh %208 : vector<8x32xf32>
    %210 = arith.mulf %203, %209 : vector<8x32xf32>
    %211 = vector.extract_strided_slice %192 {offsets = [0, 128], sizes = [8, 128], strides = [1, 1]} : vector<8x256xf32> to vector<8x128xf32>
    %212 = arith.negf %211 : vector<8x128xf32>
    %213 = math.exp %212 : vector<8x128xf32>
    %cst_27 = arith.constant 1.000000e+00 : f32
    %214 = vector.broadcast %cst_27 : f32 to vector<8x128xf32>
    %215 = arith.addf %214, %213 : vector<8x128xf32>
    %216 = arith.divf %214, %215 : vector<8x128xf32>
    %217 = vector.extract_strided_slice %216 {offsets = [0, 0], sizes = [8, 32], strides = [1, 1]} : vector<8x128xf32> to vector<8x32xf32>
    %218 = vector.extract_strided_slice %216 {offsets = [0, 32], sizes = [8, 32], strides = [1, 1]} : vector<8x128xf32> to vector<8x32xf32>
    %219 = vector.extract_strided_slice %216 {offsets = [0, 96], sizes = [8, 32], strides = [1, 1]} : vector<8x128xf32> to vector<8x32xf32>
    %220 = vector.extract_strided_slice %211 {offsets = [0, 64], sizes = [8, 32], strides = [1, 1]} : vector<8x128xf32> to vector<8x32xf32>
    %221 = math.tanh %220 : vector<8x32xf32>
    %222 = arith.mulf %218, %185 : vector<8x32xf32>
    %223 = arith.mulf %217, %221 : vector<8x32xf32>
    %224 = arith.addf %222, %223 : vector<8x32xf32>
    %225 = math.tanh %224 : vector<8x32xf32>
    %226 = arith.mulf %219, %225 : vector<8x32xf32>
    %227 = tpu.concatenate %210, %226 in 1 : vector<8x32xf32>, vector<8x32xf32> -> vector<8x64xf32>
    %228 = arith.truncf %227 : vector<8x64xf32> to vector<8x64xbf16>
    %cst_28 = arith.constant dense<0.000000e+00> : vector<8x256xf32>
    %229 = tpu.matmul %228, %3, %cst_28 {dimension_numbers = #tpu.dot_dimension_numbers<[1], [0], [0], [1], [0, 0, 1, 1], [], []>} : vector<8x64xbf16>, vector<64x256xbf16>, vector<8x256xf32> -> vector<8x256xf32>
    %230 = vector.broadcast %4 : vector<1x256xf32> to vector<8x256xf32>
    %231 = arith.addf %229, %230 : vector<8x256xf32>
    %232 = vector.extract_strided_slice %231 {offsets = [0, 0], sizes = [8, 128], strides = [1, 1]} : vector<8x256xf32> to vector<8x128xf32>
    %233 = vector.extract_strided_slice %2 {offsets = [48, 0], sizes = [8, 128], strides = [1, 1]} : vector<64x128xf32> to vector<8x128xf32>
    %234 = arith.addf %232, %233 : vector<8x128xf32>
    %235 = arith.negf %234 : vector<8x128xf32>
    %236 = math.exp %235 : vector<8x128xf32>
    %cst_29 = arith.constant 1.000000e+00 : f32
    %237 = vector.broadcast %cst_29 : f32 to vector<8x128xf32>
    %238 = arith.addf %237, %236 : vector<8x128xf32>
    %239 = arith.divf %237, %238 : vector<8x128xf32>
    %240 = vector.extract_strided_slice %239 {offsets = [0, 0], sizes = [8, 32], strides = [1, 1]} : vector<8x128xf32> to vector<8x32xf32>
    %241 = vector.extract_strided_slice %239 {offsets = [0, 32], sizes = [8, 32], strides = [1, 1]} : vector<8x128xf32> to vector<8x32xf32>
    %242 = vector.extract_strided_slice %239 {offsets = [0, 96], sizes = [8, 32], strides = [1, 1]} : vector<8x128xf32> to vector<8x32xf32>
    %243 = vector.extract_strided_slice %234 {offsets = [0, 64], sizes = [8, 32], strides = [1, 1]} : vector<8x128xf32> to vector<8x32xf32>
    %244 = math.tanh %243 : vector<8x32xf32>
    %245 = arith.mulf %241, %208 : vector<8x32xf32>
    %246 = arith.mulf %240, %244 : vector<8x32xf32>
    %247 = arith.addf %245, %246 : vector<8x32xf32>
    %248 = math.tanh %247 : vector<8x32xf32>
    %249 = arith.mulf %242, %248 : vector<8x32xf32>
    %250 = vector.extract_strided_slice %231 {offsets = [0, 128], sizes = [8, 128], strides = [1, 1]} : vector<8x256xf32> to vector<8x128xf32>
    %251 = arith.negf %250 : vector<8x128xf32>
    %252 = math.exp %251 : vector<8x128xf32>
    %cst_30 = arith.constant 1.000000e+00 : f32
    %253 = vector.broadcast %cst_30 : f32 to vector<8x128xf32>
    %254 = arith.addf %253, %252 : vector<8x128xf32>
    %255 = arith.divf %253, %254 : vector<8x128xf32>
    %256 = vector.extract_strided_slice %255 {offsets = [0, 0], sizes = [8, 32], strides = [1, 1]} : vector<8x128xf32> to vector<8x32xf32>
    %257 = vector.extract_strided_slice %255 {offsets = [0, 32], sizes = [8, 32], strides = [1, 1]} : vector<8x128xf32> to vector<8x32xf32>
    %258 = vector.extract_strided_slice %255 {offsets = [0, 96], sizes = [8, 32], strides = [1, 1]} : vector<8x128xf32> to vector<8x32xf32>
    %259 = vector.extract_strided_slice %250 {offsets = [0, 64], sizes = [8, 32], strides = [1, 1]} : vector<8x128xf32> to vector<8x32xf32>
    %260 = math.tanh %259 : vector<8x32xf32>
    %261 = arith.mulf %257, %224 : vector<8x32xf32>
    %262 = arith.mulf %256, %260 : vector<8x32xf32>
    %263 = arith.addf %261, %262 : vector<8x32xf32>
    %264 = math.tanh %263 : vector<8x32xf32>
    %265 = arith.mulf %258, %264 : vector<8x32xf32>
    %266 = tpu.concatenate %249, %265 in 1 : vector<8x32xf32>, vector<8x32xf32> -> vector<8x64xf32>
    %267 = arith.truncf %266 : vector<8x64xf32> to vector<8x64xbf16>
    %cst_31 = arith.constant dense<0.000000e+00> : vector<8x256xf32>
    %268 = tpu.matmul %267, %3, %cst_31 {dimension_numbers = #tpu.dot_dimension_numbers<[1], [0], [0], [1], [0, 0, 1, 1], [], []>} : vector<8x64xbf16>, vector<64x256xbf16>, vector<8x256xf32> -> vector<8x256xf32>
    %269 = vector.broadcast %4 : vector<1x256xf32> to vector<8x256xf32>
    %270 = arith.addf %268, %269 : vector<8x256xf32>
    %271 = vector.extract_strided_slice %270 {offsets = [0, 0], sizes = [8, 128], strides = [1, 1]} : vector<8x256xf32> to vector<8x128xf32>
    %272 = vector.extract_strided_slice %2 {offsets = [56, 0], sizes = [8, 128], strides = [1, 1]} : vector<64x128xf32> to vector<8x128xf32>
    %273 = arith.addf %271, %272 : vector<8x128xf32>
    %274 = arith.negf %273 : vector<8x128xf32>
    %275 = math.exp %274 : vector<8x128xf32>
    %cst_32 = arith.constant 1.000000e+00 : f32
    %276 = vector.broadcast %cst_32 : f32 to vector<8x128xf32>
    %277 = arith.addf %276, %275 : vector<8x128xf32>
    %278 = arith.divf %276, %277 : vector<8x128xf32>
    %279 = vector.extract_strided_slice %278 {offsets = [0, 0], sizes = [8, 32], strides = [1, 1]} : vector<8x128xf32> to vector<8x32xf32>
    %280 = vector.extract_strided_slice %278 {offsets = [0, 32], sizes = [8, 32], strides = [1, 1]} : vector<8x128xf32> to vector<8x32xf32>
    %281 = vector.extract_strided_slice %278 {offsets = [0, 96], sizes = [8, 32], strides = [1, 1]} : vector<8x128xf32> to vector<8x32xf32>
    %282 = vector.extract_strided_slice %273 {offsets = [0, 64], sizes = [8, 32], strides = [1, 1]} : vector<8x128xf32> to vector<8x32xf32>
    %283 = math.tanh %282 : vector<8x32xf32>
    %284 = arith.mulf %280, %247 : vector<8x32xf32>
    %285 = arith.mulf %279, %283 : vector<8x32xf32>
    %286 = arith.addf %284, %285 : vector<8x32xf32>
    %287 = math.tanh %286 : vector<8x32xf32>
    %288 = arith.mulf %281, %287 : vector<8x32xf32>
    %289 = vector.extract_strided_slice %270 {offsets = [0, 128], sizes = [8, 128], strides = [1, 1]} : vector<8x256xf32> to vector<8x128xf32>
    %290 = arith.negf %289 : vector<8x128xf32>
    %291 = math.exp %290 : vector<8x128xf32>
    %cst_33 = arith.constant 1.000000e+00 : f32
    %292 = vector.broadcast %cst_33 : f32 to vector<8x128xf32>
    %293 = arith.addf %292, %291 : vector<8x128xf32>
    %294 = arith.divf %292, %293 : vector<8x128xf32>
    %295 = vector.extract_strided_slice %294 {offsets = [0, 0], sizes = [8, 32], strides = [1, 1]} : vector<8x128xf32> to vector<8x32xf32>
    %296 = vector.extract_strided_slice %294 {offsets = [0, 32], sizes = [8, 32], strides = [1, 1]} : vector<8x128xf32> to vector<8x32xf32>
    %297 = vector.extract_strided_slice %294 {offsets = [0, 96], sizes = [8, 32], strides = [1, 1]} : vector<8x128xf32> to vector<8x32xf32>
    %298 = vector.extract_strided_slice %289 {offsets = [0, 64], sizes = [8, 32], strides = [1, 1]} : vector<8x128xf32> to vector<8x32xf32>
    %299 = math.tanh %298 : vector<8x32xf32>
    %300 = arith.mulf %296, %263 : vector<8x32xf32>
    %301 = arith.mulf %295, %299 : vector<8x32xf32>
    %302 = arith.addf %300, %301 : vector<8x32xf32>
    %303 = math.tanh %302 : vector<8x32xf32>
    %304 = arith.mulf %297, %303 : vector<8x32xf32>
    %305 = tpu.concatenate %288, %304 in 1 : vector<8x32xf32>, vector<8x32xf32> -> vector<8x64xf32>
    %306 = arith.truncf %305 : vector<8x64xf32> to vector<8x64xbf16>
    %cst_34 = arith.constant dense<0.000000e+00> : vector<8x256xf32>
    %307 = tpu.matmul %306, %3, %cst_34 {dimension_numbers = #tpu.dot_dimension_numbers<[1], [0], [0], [1], [0, 0, 1, 1], [], []>} : vector<8x64xbf16>, vector<64x256xbf16>, vector<8x256xf32> -> vector<8x256xf32>
    %308 = vector.broadcast %4 : vector<1x256xf32> to vector<8x256xf32>
    %309 = arith.addf %307, %308 : vector<8x256xf32>
    %310 = vector.extract_strided_slice %309 {offsets = [0, 128], sizes = [8, 128], strides = [1, 1]} : vector<8x256xf32> to vector<8x128xf32>
    %311 = arith.negf %310 : vector<8x128xf32>
    %312 = math.exp %311 : vector<8x128xf32>
    %cst_35 = arith.constant 1.000000e+00 : f32
    %313 = vector.broadcast %cst_35 : f32 to vector<8x128xf32>
    %314 = arith.addf %313, %312 : vector<8x128xf32>
    %315 = arith.divf %313, %314 : vector<8x128xf32>
    %316 = vector.extract_strided_slice %315 {offsets = [0, 0], sizes = [8, 32], strides = [1, 1]} : vector<8x128xf32> to vector<8x32xf32>
    %317 = vector.extract_strided_slice %315 {offsets = [0, 32], sizes = [8, 32], strides = [1, 1]} : vector<8x128xf32> to vector<8x32xf32>
    %318 = vector.extract_strided_slice %315 {offsets = [0, 96], sizes = [8, 32], strides = [1, 1]} : vector<8x128xf32> to vector<8x32xf32>
    %319 = vector.extract_strided_slice %310 {offsets = [0, 64], sizes = [8, 32], strides = [1, 1]} : vector<8x128xf32> to vector<8x32xf32>
    %320 = math.tanh %319 : vector<8x32xf32>
    %321 = arith.mulf %317, %302 : vector<8x32xf32>
    %322 = arith.mulf %316, %320 : vector<8x32xf32>
    %323 = arith.addf %321, %322 : vector<8x32xf32>
    %324 = math.tanh %323 : vector<8x32xf32>
    %325 = arith.mulf %318, %324 : vector<8x32xf32>
    %326 = arith.truncf %325 : vector<8x32xf32> to vector<8x32xbf16>
    %c0_36 = arith.constant 0 : index
    %c0_37 = arith.constant 0 : index
    %327 = vector.load %arg4[%c0_36, %c0_37] : memref<32x2xbf16, #tpu.memory_space<vmem>>, vector<32x2xbf16>
    %cst_38 = arith.constant dense<0.000000e+00> : vector<8x2xf32>
    %328 = tpu.matmul %326, %327, %cst_38 {dimension_numbers = #tpu.dot_dimension_numbers<[1], [0], [0], [1], [0, 0, 1, 1], [], []>} : vector<8x32xbf16>, vector<32x2xbf16>, vector<8x2xf32> -> vector<8x2xf32>
    %c0_39 = arith.constant 0 : index
    %c0_40 = arith.constant 0 : index
    %329 = vector.load %arg5[%c0_39, %c0_40] : memref<1x2xf32, #tpu.memory_space<vmem>>, vector<1x2xf32>
    %330 = vector.broadcast %329 : vector<1x2xf32> to vector<8x2xf32>
    %331 = arith.addf %328, %330 : vector<8x2xf32>
    %332 = vector.extract_strided_slice %331 {offsets = [0, 0], sizes = [2, 2], strides = [1, 1]} : vector<8x2xf32> to vector<2x2xf32>
    %c0_41 = arith.constant 0 : index
    %c0_42 = arith.constant 0 : index
    %333 = vector.load %arg6[%c0_41, %c0_42] : memref<2x2xf32, #tpu.memory_space<vmem>>, vector<2x2xf32>
    tpu.vector_store %arg6[%c0_41, %c0_42], %332 {strides = array<i32>} : memref<2x2xf32, #tpu.memory_space<vmem>>, vector<2x2xf32>,
    return
  }
}

</mosaic_0001>

<llo_original>
// kernel: lstm_glove_classifier.1
$region0: #{lstm_glove_classifier.1}
  #allocation0 [shape = 'u32[]', space=smem, size = 0x4, offset = 0x4, fixed_abs, tag = 'smem constant byte address 0x4 - core index']
  #allocation1 [shape = 'u32[144,128]{1,0:T(1,128)}', space=vmem, size = 0x12000, scoped, tag = 'internal scratch']
  %s0 = inlined_call_operand.vmem [shape: bf16[64,32], index: 0, kind: input, shape index: {}]
  %s1 = inlined_call_operand.vmem [shape: bf16[32,128], index: 1, kind: input, shape index: {}]
  %s2 = inlined_call_operand.vmem [shape: bf16[64,256], index: 2, kind: input, shape index: {}]
  %s3 = inlined_call_operand.vmem [shape: f32[1,256], index: 3, kind: input, shape index: {}]
  %s4 = inlined_call_operand.vmem [shape: bf16[32,2], index: 4, kind: input, shape index: {}]
  %s5 = inlined_call_operand.vmem [shape: f32[1,2], index: 5, kind: input, shape index: {}]
  %s6 = inlined_call_operand.hbm [shape: f32[2,2], index: 6, kind: output, shape index: {}]
  %s7 = sld [smem:[#allocation0]]
  $region34: #{lstm_glove_classifier.1} parent=0
    _
  %s9 = ssub.s32 1, %s7
  %s10 = scalar_select 0, %s9, %s7
  $region1: #{lstm_glove_classifier.1} parent=0
    #allocation2 [shape = 'u8[1024]{0}', space=vmem, size = 0x400, scoped, tag = 'output window, operand 0, single buffered']
    #allocation3 [shape = 's32[1]{0}', space=sflag, size = 0x4, scoped, tag = 'scoped memory for lstm_glove_classifier.1']
    %11 = vsyncpa [#allocation3], 0
    // Predicated region
    $region2: #{lstm_glove_classifier.1} parent=1 // pred_check
      _
    $region3: #{lstm_glove_classifier.1} parent=1 // pred_check_branch
      %13 = sbr.rel (0) target = $region5
    $region4: #{lstm_glove_classifier.1} parent=1 // pred_region
      _
    $region5: #{lstm_glove_classifier.1} parent=1 // pred_fallthru
      _
    // Predicated region
    $region6: #{lstm_glove_classifier.1} parent=1 // pred_check
      _
    $region7: #{lstm_glove_classifier.1} parent=1 // pred_check_branch
      %15 = sbr.rel (0) target = $region9
    $region8: #{lstm_glove_classifier.1} parent=1 // pred_region
      _
    $region9: #{lstm_glove_classifier.1} parent=1 // pred_fallthru
      _
    // Predicated region
    $region10: #{lstm_glove_classifier.1} parent=1 // pred_check
      _
    $region11: #{lstm_glove_classifier.1} parent=1 // pred_check_branch
      %17 = sbr.rel (0) target = $region13
    $region12: #{lstm_glove_classifier.1} parent=1 // pred_region
      _
    $region13: #{lstm_glove_classifier.1} parent=1 // pred_fallthru
      _
    // Predicated region
    $region14: #{lstm_glove_classifier.1} parent=1 // pred_check
      _
    $region15: #{lstm_glove_classifier.1} parent=1 // pred_check_branch
      %19 = sbr.rel (0) target = $region17
    $region16: #{lstm_glove_classifier.1} parent=1 // pred_region
      _
    $region17: #{lstm_glove_classifier.1} parent=1 // pred_fallthru
      _
    // Predicated region
    $region18: #{lstm_glove_classifier.1} parent=1 // pred_check
      _
    $region19: #{lstm_glove_classifier.1} parent=1 // pred_check_branch
      %21 = sbr.rel (0) target = $region21
    $region20: #{lstm_glove_classifier.1} parent=1 // pred_region
      _
    $region21: #{lstm_glove_classifier.1} parent=1 // pred_fallthru
      _
    // Predicated region
    $region22: #{lstm_glove_classifier.1} parent=1 // pred_check
      _
    $region23: #{lstm_glove_classifier.1} parent=1 // pred_check_branch
      %23 = sbr.rel (0) target = $region25
    $region24: #{lstm_glove_classifier.1} parent=1 // pred_region
      _
    $region25: #{lstm_glove_classifier.1} parent=1 // pred_fallthru
      _
    %v25 = vld [vmem:[%s0] sm:$0xf]
    %v26 = vld [vmem:[%s0 + $0x4] sm:$0xf]
    %v27 = vld [vmem:[%s0 + $0x8] sm:$0xf]
    %v28 = vld [vmem:[%s0 + $0xc] sm:$0xf]
    %v29 = vld [vmem:[%s0 + $0x10] sm:$0xf]
    %v30 = vld [vmem:[%s0 + $0x14] sm:$0xf]
    %v31 = vld [vmem:[%s0 + $0x18] sm:$0xf]
    %v32 = vld [vmem:[%s0 + $0x1c] sm:$0xf]
    %v33 = vld [vmem:[%s1] sm:$0xf]
    %v34 = vld [vmem:[%s1 + $0x4] sm:$0xf]
    %v35 = vld [vmem:[%s1 + $0x8] sm:$0xf]
    %v36 = vld [vmem:[%s1 + $0xc] sm:$0xf]
    %v45 = vunpack.c.l.b16 %v25
    %v46 = vunpack.c.l.b16 %v26
    %v47 = vunpack.c.l.b16 %v27
    %v48 = vunpack.c.l.b16 %v28
    %v49 = vunpack.c.l.b16 %v29
    %v50 = vunpack.c.l.b16 %v30
    %v51 = vunpack.c.l.b16 %v31
    %v52 = vunpack.c.l.b16 %v32
    %v53 = vpack.c.b16 %v46, %v45
    %v54 = vpack.c.b16 %v48, %v47
    %v55 = vpack.c.b16 %v50, %v49
    %v56 = vpack.c.b16 %v52, %v51
    %v61 = vunpack.c.l.b16 %v33
    %v62 = vunpack.c.l.b16 %v34
    %v63 = vunpack.c.l.b16 %v35
    %v64 = vunpack.c.l.b16 %v36
    %v65 = vpack.c.b16 %v62, %v61
    %v66 = vpack.c.b16 %v64, %v63
    %vm69 = vcmask 261120
    %v71 = vsel %vm69, %v53, 0
    %v74 = vsel %vm69, %v54, 0
    %v77 = vsel %vm69, %v55, 0
    %v80 = vsel %vm69, %v56, 0
    %82 = vmatprep.subr.bf16.mxu0 0
    %83 = vmatpush1.bf16.msra.mxu0 %v65
    %84 = vmatprep.subr.bf16.mxu0 0
    %85 = vmatpush1.bf16.msra.mxu0 %v66
    %86 = vmatprep.subr.bf16.mxu0 0
    %87 = vmatpush1.bf16.msra.mxu0 0
    %88 = vmatprep.subr.bf16.mxu0 0
    %89 = vmatpush1.bf16.msra.mxu0 0
    %90 = vmatprep.subr.bf16.mxu0 0
    %91 = vmatpush1.bf16.msra.mxu0 0
    %92 = vmatprep.subr.bf16.mxu0 0
    %93 = vmatpush1.bf16.msra.mxu0 0
    %94 = vmatprep.subr.bf16.mxu0 0
    %95 = vmatpush1.bf16.msra.mxu0 0
    %96 = vmatprep.subr.bf16.mxu0 0
    %97 = vmatpush1.bf16.msra.mxu0 0
    %98 = vmatprep.subr.bf16.mxu0 0
    %99 = vmatpush1.bf16.msra.mxu0 0
    %100 = vmatprep.subr.bf16.mxu0 0
    %101 = vmatpush1.bf16.msra.mxu0 0
    %102 = vmatprep.subr.bf16.mxu0 0
    %103 = vmatpush1.bf16.msra.mxu0 0
    %104 = vmatprep.subr.bf16.mxu0 0
    %105 = vmatpush1.bf16.msra.mxu0 0
    %106 = vmatprep.subr.bf16.mxu0 0
    %107 = vmatpush1.bf16.msra.mxu0 0
    %108 = vmatprep.subr.bf16.mxu0 0
    %109 = vmatpush1.bf16.msra.mxu0 0
    %110 = vmatprep.subr.bf16.mxu0 0
    %111 = vmatpush1.bf16.msra.mxu0 0
    %112 = vmatprep.subr.bf16.mxu0 0
    %113 = vmatpush1.bf16.msra.mxu0 0
    %114 = vmatprep.mubr.bf16.mxu0 0
    %115 = vmatmul.mubr.bf16.gmra.mrb[0].mxu0 %v71
    %v116 = vpop.f32.mrb[0].mxu0
    %v117 = vadd.f32 0.0, %v116
    %v118 = vpop.f32.mrb[0].mxu0
    %v119 = vpop.f32.mrb[0].mxu0
    %v120 = vadd.f32 0.0, %v119
    %v121 = vpop.f32.mrb[0].mxu0
    %122 = vmatprep.mubr.bf16.mxu0 0
    %123 = vmatmul.mubr.bf16.gmra.mrb[0].mxu0 %v74
    %v124 = vpop.f32.mrb[0].mxu0
    %v125 = vadd.f32 0.0, %v124
    %v126 = vpop.f32.mrb[0].mxu0
    %v127 = vpop.f32.mrb[0].mxu0
    %v128 = vadd.f32 0.0, %v127
    %v129 = vpop.f32.mrb[0].mxu0
    %130 = vmatprep.mubr.bf16.mxu0 0
    %131 = vmatmul.mubr.bf16.gmra.mrb[0].mxu0 %v77
    %v132 = vpop.f32.mrb[0].mxu0
    %v133 = vadd.f32 0.0, %v132
    %v134 = vpop.f32.mrb[0].mxu0
    %v135 = vpop.f32.mrb[0].mxu0
    %v136 = vadd.f32 0.0, %v135
    %v137 = vpop.f32.mrb[0].mxu0
    %138 = vmatprep.mubr.bf16.mxu0 0
    %139 = vmatmul.mubr.bf16.gmra.mrb[0].mxu0 %v80
    %v140 = vpop.f32.mrb[0].mxu0
    %v141 = vadd.f32 0.0, %v140
    %v142 = vpop.f32.mrb[0].mxu0
    %v143 = vpop.f32.mrb[0].mxu0
    %v144 = vadd.f32 0.0, %v143
    %v145 = vpop.f32.mrb[0].mxu0
    %146 = vdwg.mxu0
    %v147 = vld [vmem:[%s2] sm:$0xff]
    %v148 = vld [vmem:[%s2 + $0x8] sm:$0xff]
    %v149 = vld [vmem:[%s2 + $0x10] sm:$0xff]
    %v150 = vld [vmem:[%s2 + $0x18] sm:$0xff]
    %v151 = vld [vmem:[%s2 + $0x20] sm:$0xff]
    %v152 = vld [vmem:[%s2 + $0x28] sm:$0xff]
    %v153 = vld [vmem:[%s2 + $0x30] sm:$0xff]
    %v154 = vld [vmem:[%s2 + $0x38] sm:$0xff]
    %v155 = vld [vmem:[%s3] sm:$0x3]
    %v156 = vpack.c.bf16 0.0, 0.0
    %v158 = vlaneseq
    %v159 = vshrl.u32 %v158, 7
    %v160 = vsub.s32 0, %v159
    %v161 = vrot.slane %v155, %v160
    %v162 = vlaneseq
    %v163 = vshrl.u32 %v162, 7
    %v164 = vsub.s32 1, %v163
    %v165 = vrot.slane %v155, %v164
    %v176 = vunpack.c.l.b16 %v147
    %v177 = vunpack.c.h.b16 %v147
    %v178 = vunpack.c.l.b16 %v148
    %v179 = vunpack.c.h.b16 %v148
    %v180 = vunpack.c.l.b16 %v149
    %v181 = vunpack.c.h.b16 %v149
    %v182 = vunpack.c.l.b16 %v150
    %v183 = vunpack.c.h.b16 %v150
    %v184 = vunpack.c.l.b16 %v151
    %v185 = vunpack.c.h.b16 %v151
    %v186 = vunpack.c.l.b16 %v152
    %v187 = vunpack.c.h.b16 %v152
    %v188 = vunpack.c.l.b16 %v153
    %v189 = vunpack.c.h.b16 %v153
    %v190 = vunpack.c.l.b16 %v154
    %v191 = vunpack.c.h.b16 %v154
    %v192 = vpack.c.b16 %v178, %v176
    %v193 = vpack.c.b16 %v179, %v177
    %v194 = vpack.c.b16 %v182, %v180
    %v195 = vpack.c.b16 %v183, %v181
    %v196 = vpack.c.b16 %v186, %v184
    %v197 = vpack.c.b16 %v187, %v185
    %v198 = vpack.c.b16 %v190, %v188
    %v199 = vpack.c.b16 %v191, %v189
    %vm208 = vcmask 523264
    %v210 = vsel %vm208, %v156, 0
    %212 = vmatprep.subr.bf16.mxu0 %v193
    %213 = vmatpush1.bf16.msra.mxu0 %v192
    %214 = vmatprep.subr.bf16.mxu0 %v195
    %215 = vmatpush1.bf16.msra.mxu0 %v194
    %216 = vmatprep.subr.bf16.mxu0 %v197
    %217 = vmatpush1.bf16.msra.mxu0 %v196
    %218 = vmatprep.subr.bf16.mxu0 %v199
    %219 = vmatpush1.bf16.msra.mxu0 %v198
    %220 = vmatprep.subr.bf16.mxu0 0
    %221 = vmatpush1.bf16.msra.mxu0 0
    %222 = vmatprep.subr.bf16.mxu0 0
    %223 = vmatpush1.bf16.msra.mxu0 0
    %224 = vmatprep.subr.bf16.mxu0 0
    %225 = vmatpush1.bf16.msra.mxu0 0
    %226 = vmatprep.subr.bf16.mxu0 0
    %227 = vmatpush1.bf16.msra.mxu0 0
    %228 = vmatprep.subr.bf16.mxu0 0
    %229 = vmatpush1.bf16.msra.mxu0 0
    %230 = vmatprep.subr.bf16.mxu0 0
    %231 = vmatpush1.bf16.msra.mxu0 0
    %232 = vmatprep.subr.bf16.mxu0 0
    %233 = vmatpush1.bf16.msra.mxu0 0
    %234 = vmatprep.subr.bf16.mxu0 0
    %235 = vmatpush1.bf16.msra.mxu0 0
    %236 = vmatprep.subr.bf16.mxu0 0
    %237 = vmatpush1.bf16.msra.mxu0 0
    %238 = vmatprep.subr.bf16.mxu0 0
    %239 = vmatpush1.bf16.msra.mxu0 0
    %240 = vmatprep.subr.bf16.mxu0 0
    %241 = vmatpush1.bf16.msra.mxu0 0
    %242 = vmatprep.subr.bf16.mxu0 0
    %243 = vmatpush1.bf16.msra.mxu0 0
    %244 = vmatprep.mubr.bf16.mxu0 0
    %245 = vmatmul.mubr.bf16.gmra.mrb[0].mxu0 %v210
    %v246 = vpop.f32.mrb[0].mxu0
    %v247 = vadd.f32 %v161, %v246
    %v248 = vpop.f32.mrb[0].mxu0
    %v249 = vpop.f32.mrb[0].mxu0
    %v250 = vpop.f32.mrb[0].mxu0
    %251 = vdwg.mxu0
    %v252 = vadd.f32 %v247, %v117
    %v253 = vxor.u32 %v252, 2147483648
    %v254 = vmul.f32 %v253, 1.442695
    %v255 = vpow.pop %v254
    %v256 = vadd.f32 %v255, 1.0
    %v257 = vrcp.pop %v256
    %v258 = vmul.f32 1.0, %v257
    %v259 = vtanh.pop %v252
    %v260 = vmul.f32 %v258, 0.0
    %262 = vrot.lane.b32.xlu0 %v259, 64
    %v263 = vpop.permute.xlu0 %262
    %v265 = vmul.f32 %v258, %v263
    %267 = vrot.lane.b32.xlu0 %v265, 32
    %v268 = vpop.permute.xlu0 %267
    %v270 = vadd.f32 %v260, %v268
    %v271 = vtanh.pop %v270
    %273 = vrot.lane.b32.xlu0 %v271, 64
    %v274 = vpop.permute.xlu0 %273
    %v276 = vmul.f32 %v258, %v274
    %278 = vrot.lane.b32.xlu0 %v276, 32
    %v279 = vpop.permute.xlu0 %278
    %v281 = vsel %vm69, %v279, 0.0
    %v282 = vpack.c.bf16 %v281, %v281
    %v284 = vsel %vm208, %v282, 0
    %286 = vmatprep.subr.bf16.mxu0 %v193
    %287 = vmatpush1.bf16.msra.mxu0 %v192
    %288 = vmatprep.subr.bf16.mxu0 %v195
    %289 = vmatpush1.bf16.msra.mxu0 %v194
    %290 = vmatprep.subr.bf16.mxu0 %v197
    %291 = vmatpush1.bf16.msra.mxu0 %v196
    %292 = vmatprep.subr.bf16.mxu0 %v199
    %293 = vmatpush1.bf16.msra.mxu0 %v198
    %294 = vmatprep.subr.bf16.mxu0 0
    %295 = vmatpush1.bf16.msra.mxu0 0
    %296 = vmatprep.subr.bf16.mxu0 0
    %297 = vmatpush1.bf16.msra.mxu0 0
    %298 = vmatprep.subr.bf16.mxu0 0
    %299 = vmatpush1.bf16.msra.mxu0 0
    %300 = vmatprep.subr.bf16.mxu0 0
    %301 = vmatpush1.bf16.msra.mxu0 0
    %302 = vmatprep.subr.bf16.mxu0 0
    %303 = vmatpush1.bf16.msra.mxu0 0
    %304 = vmatprep.subr.bf16.mxu0 0
    %305 = vmatpush1.bf16.msra.mxu0 0
    %306 = vmatprep.subr.bf16.mxu0 0
    %307 = vmatpush1.bf16.msra.mxu0 0
    %308 = vmatprep.subr.bf16.mxu0 0
    %309 = vmatpush1.bf16.msra.mxu0 0
    %310 = vmatprep.subr.bf16.mxu0 0
    %311 = vmatpush1.bf16.msra.mxu0 0
    %312 = vmatprep.subr.bf16.mxu0 0
    %313 = vmatpush1.bf16.msra.mxu0 0
    %314 = vmatprep.subr.bf16.mxu0 0
    %315 = vmatpush1.bf16.msra.mxu0 0
    %316 = vmatprep.subr.bf16.mxu0 0
    %317 = vmatpush1.bf16.msra.mxu0 0
    %318 = vmatprep.mubr.bf16.mxu0 0
    %319 = vmatmul.mubr.bf16.gmra.mrb[0].mxu0 %v284
    %v320 = vpop.f32.mrb[0].mxu0
    %v321 = vadd.f32 %v161, %v320
    %v322 = vpop.f32.mrb[0].mxu0
    %v323 = vadd.f32 %v165, %v322
    %v324 = vpop.f32.mrb[0].mxu0
    %v325 = vpop.f32.mrb[0].mxu0
    %326 = vdwg.mxu0
    %v327 = vadd.f32 %v321, %v120
    %v328 = vxor.u32 %v327, 2147483648
    %v329 = vmul.f32 %v328, 1.442695
    %v330 = vpow.pop %v329
    %v331 = vadd.f32 %v330, 1.0
    %v332 = vrcp.pop %v331
    %v333 = vmul.f32 1.0, %v332
    %v334 = vtanh.pop %v327
    %v335 = vmul.f32 %v333, %v270
    %337 = vrot.lane.b32.xlu0 %v334, 64
    %v338 = vpop.permute.xlu0 %337
    %v340 = vmul.f32 %v333, %v338
    %342 = vrot.lane.b32.xlu0 %v340, 32
    %v343 = vpop.permute.xlu0 %342
    %v345 = vadd.f32 %v335, %v343
    %v346 = vtanh.pop %v345
    %348 = vrot.lane.b32.xlu0 %v346, 64
    %v349 = vpop.permute.xlu0 %348
    %v351 = vmul.f32 %v333, %v349
    %v352 = vxor.u32 %v323, 2147483648
    %v353 = vmul.f32 %v352, 1.442695
    %v354 = vpow.pop %v353
    %v355 = vadd.f32 %v354, 1.0
    %v356 = vrcp.pop %v355
    %v357 = vmul.f32 1.0, %v356
    %v358 = vtanh.pop %v323
    %v359 = vmul.f32 %v357, 0.0
    %361 = vrot.lane.b32.xlu0 %v358, 64
    %v362 = vpop.permute.xlu0 %361
    %v364 = vmul.f32 %v357, %v362
    %366 = vrot.lane.b32.xlu0 %v364, 32
    %v367 = vpop.permute.xlu0 %366
    %v369 = vadd.f32 %v359, %v367
    %v370 = vtanh.pop %v369
    %372 = vrot.lane.b32.xlu0 %v370, 64
    %v373 = vpop.permute.xlu0 %372
    %v375 = vmul.f32 %v357, %v373
    %377 = vrot.lane.b32.xlu0 %v351, 32
    %v378 = vpop.permute.xlu0 %377
    %381 = vrot.lane.b32.xlu0 %v375, 64
    %v382 = vpop.permute.xlu0 %381
    %v384 = vsel %vm69, %v378, %v382
    %v385 = vpack.c.bf16 %v384, %v384
    %v387 = vsel %vm208, %v385, 0
    %389 = vmatprep.subr.bf16.mxu0 %v193
    %390 = vmatpush1.bf16.msra.mxu0 %v192
    %391 = vmatprep.subr.bf16.mxu0 %v195
    %392 = vmatpush1.bf16.msra.mxu0 %v194
    %393 = vmatprep.subr.bf16.mxu0 %v197
    %394 = vmatpush1.bf16.msra.mxu0 %v196
    %395 = vmatprep.subr.bf16.mxu0 %v199
    %396 = vmatpush1.bf16.msra.mxu0 %v198
    %397 = vmatprep.subr.bf16.mxu0 0
    %398 = vmatpush1.bf16.msra.mxu0 0
    %399 = vmatprep.subr.bf16.mxu0 0
    %400 = vmatpush1.bf16.msra.mxu0 0
    %401 = vmatprep.subr.bf16.mxu0 0
    %402 = vmatpush1.bf16.msra.mxu0 0
    %403 = vmatprep.subr.bf16.mxu0 0
    %404 = vmatpush1.bf16.msra.mxu0 0
    %405 = vmatprep.subr.bf16.mxu0 0
    %406 = vmatpush1.bf16.msra.mxu0 0
    %407 = vmatprep.subr.bf16.mxu0 0
    %408 = vmatpush1.bf16.msra.mxu0 0
    %409 = vmatprep.subr.bf16.mxu0 0
    %410 = vmatpush1.bf16.msra.mxu0 0
    %411 = vmatprep.subr.bf16.mxu0 0
    %412 = vmatpush1.bf16.msra.mxu0 0
    %413 = vmatprep.subr.bf16.mxu0 0
    %414 = vmatpush1.bf16.msra.mxu0 0
    %415 = vmatprep.subr.bf16.mxu0 0
    %416 = vmatpush1.bf16.msra.mxu0 0
    %417 = vmatprep.subr.bf16.mxu0 0
    %418 = vmatpush1.bf16.msra.mxu0 0
    %419 = vmatprep.subr.bf16.mxu0 0
    %420 = vmatpush1.bf16.msra.mxu0 0
    %421 = vmatprep.mubr.bf16.mxu0 0
    %422 = vmatmul.mubr.bf16.gmra.mrb[0].mxu0 %v387
    %v423 = vpop.f32.mrb[0].mxu0
    %v424 = vadd.f32 %v161, %v423
    %v425 = vpop.f32.mrb[0].mxu0
    %v426 = vadd.f32 %v165, %v425
    %v427 = vpop.f32.mrb[0].mxu0
    %v428 = vpop.f32.mrb[0].mxu0
    %429 = vdwg.mxu0
    %v430 = vadd.f32 %v424, %v125
    %v431 = vxor.u32 %v430, 2147483648
    %v432 = vmul.f32 %v431, 1.442695
    %v433 = vpow.pop %v432
    %v434 = vadd.f32 %v433, 1.0
    %v435 = vrcp.pop %v434
    %v436 = vmul.f32 1.0, %v435
    %v437 = vtanh.pop %v430
    %v438 = vmul.f32 %v436, %v345
    %440 = vrot.lane.b32.xlu0 %v437, 64
    %v441 = vpop.permute.xlu0 %440
    %v443 = vmul.f32 %v436, %v441
    %445 = vrot.lane.b32.xlu0 %v443, 32
    %v446 = vpop.permute.xlu0 %445
    %v448 = vadd.f32 %v438, %v446
    %v449 = vtanh.pop %v448
    %451 = vrot.lane.b32.xlu0 %v449, 64
    %v452 = vpop.permute.xlu0 %451
    %v454 = vmul.f32 %v436, %v452
    %v455 = vxor.u32 %v426, 2147483648
    %v456 = vmul.f32 %v455, 1.442695
    %v457 = vpow.pop %v456
    %v458 = vadd.f32 %v457, 1.0
    %v459 = vrcp.pop %v458
    %v460 = vmul.f32 1.0, %v459
    %v461 = vtanh.pop %v426
    %v462 = vmul.f32 %v460, %v369
    %464 = vrot.lane.b32.xlu0 %v461, 64
    %v465 = vpop.permute.xlu0 %464
    %v467 = vmul.f32 %v460, %v465
    %469 = vrot.lane.b32.xlu0 %v467, 32
    %v470 = vpop.permute.xlu0 %469
    %v472 = vadd.f32 %v462, %v470
    %v473 = vtanh.pop %v472
    %475 = vrot.lane.b32.xlu0 %v473, 64
    %v476 = vpop.permute.xlu0 %475
    %v478 = vmul.f32 %v460, %v476
    %480 = vrot.lane.b32.xlu0 %v454, 32
    %v481 = vpop.permute.xlu0 %480
    %484 = vrot.lane.b32.xlu0 %v478, 64
    %v485 = vpop.permute.xlu0 %484
    %v487 = vsel %vm69, %v481, %v485
    %v488 = vpack.c.bf16 %v487, %v487
    %v490 = vsel %vm208, %v488, 0
    %492 = vmatprep.subr.bf16.mxu0 %v193
    %493 = vmatpush1.bf16.msra.mxu0 %v192
    %494 = vmatprep.subr.bf16.mxu0 %v195
    %495 = vmatpush1.bf16.msra.mxu0 %v194
    %496 = vmatprep.subr.bf16.mxu0 %v197
    %497 = vmatpush1.bf16.msra.mxu0 %v196
    %498 = vmatprep.subr.bf16.mxu0 %v199
    %499 = vmatpush1.bf16.msra.mxu0 %v198
    %500 = vmatprep.subr.bf16.mxu0 0
    %501 = vmatpush1.bf16.msra.mxu0 0
    %502 = vmatprep.subr.bf16.mxu0 0
    %503 = vmatpush1.bf16.msra.mxu0 0
    %504 = vmatprep.subr.bf16.mxu0 0
    %505 = vmatpush1.bf16.msra.mxu0 0
    %506 = vmatprep.subr.bf16.mxu0 0
    %507 = vmatpush1.bf16.msra.mxu0 0
    %508 = vmatprep.subr.bf16.mxu0 0
    %509 = vmatpush1.bf16.msra.mxu0 0
    %510 = vmatprep.subr.bf16.mxu0 0
    %511 = vmatpush1.bf16.msra.mxu0 0
    %512 = vmatprep.subr.bf16.mxu0 0
    %513 = vmatpush1.bf16.msra.mxu0 0
    %514 = vmatprep.subr.bf16.mxu0 0
    %515 = vmatpush1.bf16.msra.mxu0 0
    %516 = vmatprep.subr.bf16.mxu0 0
    %517 = vmatpush1.bf16.msra.mxu0 0
    %518 = vmatprep.subr.bf16.mxu0 0
    %519 = vmatpush1.bf16.msra.mxu0 0
    %520 = vmatprep.subr.bf16.mxu0 0
    %521 = vmatpush1.bf16.msra.mxu0 0
    %522 = vmatprep.subr.bf16.mxu0 0
    %523 = vmatpush1.bf16.msra.mxu0 0
    %524 = vmatprep.mubr.bf16.mxu0 0
    %525 = vmatmul.mubr.bf16.gmra.mrb[0].mxu0 %v490
    %v526 = vpop.f32.mrb[0].mxu0
    %v527 = vadd.f32 %v161, %v526
    %v528 = vpop.f32.mrb[0].mxu0
    %v529 = vadd.f32 %v165, %v528
    %v530 = vpop.f32.mrb[0].mxu0
    %v531 = vpop.f32.mrb[0].mxu0
    %532 = vdwg.mxu0
    %v533 = vadd.f32 %v527, %v128
    %v534 = vxor.u32 %v533, 2147483648
    %v535 = vmul.f32 %v534, 1.442695
    %v536 = vpow.pop %v535
    %v537 = vadd.f32 %v536, 1.0
    %v538 = vrcp.pop %v537
    %v539 = vmul.f32 1.0, %v538
    %v540 = vtanh.pop %v533
    %v541 = vmul.f32 %v539, %v448
    %543 = vrot.lane.b32.xlu0 %v540, 64
    %v544 = vpop.permute.xlu0 %543
    %v546 = vmul.f32 %v539, %v544
    %548 = vrot.lane.b32.xlu0 %v546, 32
    %v549 = vpop.permute.xlu0 %548
    %v551 = vadd.f32 %v541, %v549
    %v552 = vtanh.pop %v551
    %554 = vrot.lane.b32.xlu0 %v552, 64
    %v555 = vpop.permute.xlu0 %554
    %v557 = vmul.f32 %v539, %v555
    %v558 = vxor.u32 %v529, 2147483648
    %v559 = vmul.f32 %v558, 1.442695
    %v560 = vpow.pop %v559
    %v561 = vadd.f32 %v560, 1.0
    %v562 = vrcp.pop %v561
    %v563 = vmul.f32 1.0, %v562
    %v564 = vtanh.pop %v529
    %v565 = vmul.f32 %v563, %v472
    %567 = vrot.lane.b32.xlu0 %v564, 64
    %v568 = vpop.permute.xlu0 %567
    %v570 = vmul.f32 %v563, %v568
    %572 = vrot.lane.b32.xlu0 %v570, 32
    %v573 = vpop.permute.xlu0 %572
    %v575 = vadd.f32 %v565, %v573
    %v576 = vtanh.pop %v575
    %578 = vrot.lane.b32.xlu0 %v576, 64
    %v579 = vpop.permute.xlu0 %578
    %v581 = vmul.f32 %v563, %v579
    %583 = vrot.lane.b32.xlu0 %v557, 32
    %v584 = vpop.permute.xlu0 %583
    %587 = vrot.lane.b32.xlu0 %v581, 64
    %v588 = vpop.permute.xlu0 %587
    %v590 = vsel %vm69, %v584, %v588
    %v591 = vpack.c.bf16 %v590, %v590
    %v593 = vsel %vm208, %v591, 0
    %595 = vmatprep.subr.bf16.mxu0 %v193
    %596 = vmatpush1.bf16.msra.mxu0 %v192
    %597 = vmatprep.subr.bf16.mxu0 %v195
    %598 = vmatpush1.bf16.msra.mxu0 %v194
    %599 = vmatprep.subr.bf16.mxu0 %v197
    %600 = vmatpush1.bf16.msra.mxu0 %v196
    %601 = vmatprep.subr.bf16.mxu0 %v199
    %602 = vmatpush1.bf16.msra.mxu0 %v198
    %603 = vmatprep.subr.bf16.mxu0 0
    %604 = vmatpush1.bf16.msra.mxu0 0
    %605 = vmatprep.subr.bf16.mxu0 0
    %606 = vmatpush1.bf16.msra.mxu0 0
    %607 = vmatprep.subr.bf16.mxu0 0
    %608 = vmatpush1.bf16.msra.mxu0 0
    %609 = vmatprep.subr.bf16.mxu0 0
    %610 = vmatpush1.bf16.msra.mxu0 0
    %611 = vmatprep.subr.bf16.mxu0 0
    %612 = vmatpush1.bf16.msra.mxu0 0
    %613 = vmatprep.subr.bf16.mxu0 0
    %614 = vmatpush1.bf16.msra.mxu0 0
    %615 = vmatprep.subr.bf16.mxu0 0
    %616 = vmatpush1.bf16.msra.mxu0 0
    %617 = vmatprep.subr.bf16.mxu0 0
    %618 = vmatpush1.bf16.msra.mxu0 0
    %619 = vmatprep.subr.bf16.mxu0 0
    %620 = vmatpush1.bf16.msra.mxu0 0
    %621 = vmatprep.subr.bf16.mxu0 0
    %622 = vmatpush1.bf16.msra.mxu0 0
    %623 = vmatprep.subr.bf16.mxu0 0
    %624 = vmatpush1.bf16.msra.mxu0 0
    %625 = vmatprep.subr.bf16.mxu0 0
    %626 = vmatpush1.bf16.msra.mxu0 0
    %627 = vmatprep.mubr.bf16.mxu0 0
    %628 = vmatmul.mubr.bf16.gmra.mrb[0].mxu0 %v593
    %v629 = vpop.f32.mrb[0].mxu0
    %v630 = vadd.f32 %v161, %v629
    %v631 = vpop.f32.mrb[0].mxu0
    %v632 = vadd.f32 %v165, %v631
    %v633 = vpop.f32.mrb[0].mxu0
    %v634 = vpop.f32.mrb[0].mxu0
    %635 = vdwg.mxu0
    %v636 = vadd.f32 %v630, %v133
    %v637 = vxor.u32 %v636, 2147483648
    %v638 = vmul.f32 %v637, 1.442695
    %v639 = vpow.pop %v638
    %v640 = vadd.f32 %v639, 1.0
    %v641 = vrcp.pop %v640
    %v642 = vmul.f32 1.0, %v641
    %v643 = vtanh.pop %v636
    %v644 = vmul.f32 %v642, %v551
    %646 = vrot.lane.b32.xlu0 %v643, 64
    %v647 = vpop.permute.xlu0 %646
    %v649 = vmul.f32 %v642, %v647
    %651 = vrot.lane.b32.xlu0 %v649, 32
    %v652 = vpop.permute.xlu0 %651
    %v654 = vadd.f32 %v644, %v652
    %v655 = vtanh.pop %v654
    %657 = vrot.lane.b32.xlu0 %v655, 64
    %v658 = vpop.permute.xlu0 %657
    %v660 = vmul.f32 %v642, %v658
    %v661 = vxor.u32 %v632, 2147483648
    %v662 = vmul.f32 %v661, 1.442695
    %v663 = vpow.pop %v662
    %v664 = vadd.f32 %v663, 1.0
    %v665 = vrcp.pop %v664
    %v666 = vmul.f32 1.0, %v665
    %v667 = vtanh.pop %v632
    %v668 = vmul.f32 %v666, %v575
    %670 = vrot.lane.b32.xlu0 %v667, 64
    %v671 = vpop.permute.xlu0 %670
    %v673 = vmul.f32 %v666, %v671
    %675 = vrot.lane.b32.xlu0 %v673, 32
    %v676 = vpop.permute.xlu0 %675
    %v678 = vadd.f32 %v668, %v676
    %v679 = vtanh.pop %v678
    %681 = vrot.lane.b32.xlu0 %v679, 64
    %v682 = vpop.permute.xlu0 %681
    %v684 = vmul.f32 %v666, %v682
    %686 = vrot.lane.b32.xlu0 %v660, 32
    %v687 = vpop.permute.xlu0 %686
    %690 = vrot.lane.b32.xlu0 %v684, 64
    %v691 = vpop.permute.xlu0 %690
    %v693 = vsel %vm69, %v687, %v691
    %v694 = vpack.c.bf16 %v693, %v693
    %v696 = vsel %vm208, %v694, 0
    %698 = vmatprep.subr.bf16.mxu0 %v193
    %699 = vmatpush1.bf16.msra.mxu0 %v192
    %700 = vmatprep.subr.bf16.mxu0 %v195
    %701 = vmatpush1.bf16.msra.mxu0 %v194
    %702 = vmatprep.subr.bf16.mxu0 %v197
    %703 = vmatpush1.bf16.msra.mxu0 %v196
    %704 = vmatprep.subr.bf16.mxu0 %v199
    %705 = vmatpush1.bf16.msra.mxu0 %v198
    %706 = vmatprep.subr.bf16.mxu0 0
    %707 = vmatpush1.bf16.msra.mxu0 0
    %708 = vmatprep.subr.bf16.mxu0 0
    %709 = vmatpush1.bf16.msra.mxu0 0
    %710 = vmatprep.subr.bf16.mxu0 0
    %711 = vmatpush1.bf16.msra.mxu0 0
    %712 = vmatprep.subr.bf16.mxu0 0
    %713 = vmatpush1.bf16.msra.mxu0 0
    %714 = vmatprep.subr.bf16.mxu0 0
    %715 = vmatpush1.bf16.msra.mxu0 0
    %716 = vmatprep.subr.bf16.mxu0 0
    %717 = vmatpush1.bf16.msra.mxu0 0
    %718 = vmatprep.subr.bf16.mxu0 0
    %719 = vmatpush1.bf16.msra.mxu0 0
    %720 = vmatprep.subr.bf16.mxu0 0
    %721 = vmatpush1.bf16.msra.mxu0 0
    %722 = vmatprep.subr.bf16.mxu0 0
    %723 = vmatpush1.bf16.msra.mxu0 0
    %724 = vmatprep.subr.bf16.mxu0 0
    %725 = vmatpush1.bf16.msra.mxu0 0
    %726 = vmatprep.subr.bf16.mxu0 0
    %727 = vmatpush1.bf16.msra.mxu0 0
    %728 = vmatprep.subr.bf16.mxu0 0
    %729 = vmatpush1.bf16.msra.mxu0 0
    %730 = vmatprep.mubr.bf16.mxu0 0
    %731 = vmatmul.mubr.bf16.gmra.mrb[0].mxu0 %v696
    %v732 = vpop.f32.mrb[0].mxu0
    %v733 = vadd.f32 %v161, %v732
    %v734 = vpop.f32.mrb[0].mxu0
    %v735 = vadd.f32 %v165, %v734
    %v736 = vpop.f32.mrb[0].mxu0
    %v737 = vpop.f32.mrb[0].mxu0
    %738 = vdwg.mxu0
    %v739 = vadd.f32 %v733, %v136
    %v740 = vxor.u32 %v739, 2147483648
    %v741 = vmul.f32 %v740, 1.442695
    %v742 = vpow.pop %v741
    %v743 = vadd.f32 %v742, 1.0
    %v744 = vrcp.pop %v743
    %v745 = vmul.f32 1.0, %v744
    %v746 = vtanh.pop %v739
    %v747 = vmul.f32 %v745, %v654
    %749 = vrot.lane.b32.xlu0 %v746, 64
    %v750 = vpop.permute.xlu0 %749
    %v752 = vmul.f32 %v745, %v750
    %754 = vrot.lane.b32.xlu0 %v752, 32
    %v755 = vpop.permute.xlu0 %754
    %v757 = vadd.f32 %v747, %v755
    %v758 = vtanh.pop %v757
    %760 = vrot.lane.b32.xlu0 %v758, 64
    %v761 = vpop.permute.xlu0 %760
    %v763 = vmul.f32 %v745, %v761
    %v764 = vxor.u32 %v735, 2147483648
    %v765 = vmul.f32 %v764, 1.442695
    %v766 = vpow.pop %v765
    %v767 = vadd.f32 %v766, 1.0
    %v768 = vrcp.pop %v767
    %v769 = vmul.f32 1.0, %v768
    %v770 = vtanh.pop %v735
    %v771 = vmul.f32 %v769, %v678
    %773 = vrot.lane.b32.xlu0 %v770, 64
    %v774 = vpop.permute.xlu0 %773
    %v776 = vmul.f32 %v769, %v774
    %778 = vrot.lane.b32.xlu0 %v776, 32
    %v779 = vpop.permute.xlu0 %778
    %v781 = vadd.f32 %v771, %v779
    %v782 = vtanh.pop %v781
    %784 = vrot.lane.b32.xlu0 %v782, 64
    %v785 = vpop.permute.xlu0 %784
    %v787 = vmul.f32 %v769, %v785
    %789 = vrot.lane.b32.xlu0 %v763, 32
    %v790 = vpop.permute.xlu0 %789
    %793 = vrot.lane.b32.xlu0 %v787, 64
    %v794 = vpop.permute.xlu0 %793
    %v796 = vsel %vm69, %v790, %v794
    %v797 = vpack.c.bf16 %v796, %v796
    %v799 = vsel %vm208, %v797, 0
    %801 = vmatprep.subr.bf16.mxu0 %v193
    %802 = vmatpush1.bf16.msra.mxu0 %v192
    %803 = vmatprep.subr.bf16.mxu0 %v195
    %804 = vmatpush1.bf16.msra.mxu0 %v194
    %805 = vmatprep.subr.bf16.mxu0 %v197
    %806 = vmatpush1.bf16.msra.mxu0 %v196
    %807 = vmatprep.subr.bf16.mxu0 %v199
    %808 = vmatpush1.bf16.msra.mxu0 %v198
    %809 = vmatprep.subr.bf16.mxu0 0
    %810 = vmatpush1.bf16.msra.mxu0 0
    %811 = vmatprep.subr.bf16.mxu0 0
    %812 = vmatpush1.bf16.msra.mxu0 0
    %813 = vmatprep.subr.bf16.mxu0 0
    %814 = vmatpush1.bf16.msra.mxu0 0
    %815 = vmatprep.subr.bf16.mxu0 0
    %816 = vmatpush1.bf16.msra.mxu0 0
    %817 = vmatprep.subr.bf16.mxu0 0
    %818 = vmatpush1.bf16.msra.mxu0 0
    %819 = vmatprep.subr.bf16.mxu0 0
    %820 = vmatpush1.bf16.msra.mxu0 0
    %821 = vmatprep.subr.bf16.mxu0 0
    %822 = vmatpush1.bf16.msra.mxu0 0
    %823 = vmatprep.subr.bf16.mxu0 0
    %824 = vmatpush1.bf16.msra.mxu0 0
    %825 = vmatprep.subr.bf16.mxu0 0
    %826 = vmatpush1.bf16.msra.mxu0 0
    %827 = vmatprep.subr.bf16.mxu0 0
    %828 = vmatpush1.bf16.msra.mxu0 0
    %829 = vmatprep.subr.bf16.mxu0 0
    %830 = vmatpush1.bf16.msra.mxu0 0
    %831 = vmatprep.subr.bf16.mxu0 0
    %832 = vmatpush1.bf16.msra.mxu0 0
    %833 = vmatprep.mubr.bf16.mxu0 0
    %834 = vmatmul.mubr.bf16.gmra.mrb[0].mxu0 %v799
    %v835 = vpop.f32.mrb[0].mxu0
    %v836 = vadd.f32 %v161, %v835
    %v837 = vpop.f32.mrb[0].mxu0
    %v838 = vadd.f32 %v165, %v837
    %v839 = vpop.f32.mrb[0].mxu0
    %v840 = vpop.f32.mrb[0].mxu0
    %841 = vdwg.mxu0
    %v842 = vadd.f32 %v836, %v141
    %v843 = vxor.u32 %v842, 2147483648
    %v844 = vmul.f32 %v843, 1.442695
    %v845 = vpow.pop %v844
    %v846 = vadd.f32 %v845, 1.0
    %v847 = vrcp.pop %v846
    %v848 = vmul.f32 1.0, %v847
    %v849 = vtanh.pop %v842
    %v850 = vmul.f32 %v848, %v757
    %852 = vrot.lane.b32.xlu0 %v849, 64
    %v853 = vpop.permute.xlu0 %852
    %v855 = vmul.f32 %v848, %v853
    %857 = vrot.lane.b32.xlu0 %v855, 32
    %v858 = vpop.permute.xlu0 %857
    %v860 = vadd.f32 %v850, %v858
    %v861 = vtanh.pop %v860
    %863 = vrot.lane.b32.xlu0 %v861, 64
    %v864 = vpop.permute.xlu0 %863
    %v866 = vmul.f32 %v848, %v864
    %v867 = vxor.u32 %v838, 2147483648
    %v868 = vmul.f32 %v867, 1.442695
    %v869 = vpow.pop %v868
    %v870 = vadd.f32 %v869, 1.0
    %v871 = vrcp.pop %v870
    %v872 = vmul.f32 1.0, %v871
    %v873 = vtanh.pop %v838
    %v874 = vmul.f32 %v872, %v781
    %876 = vrot.lane.b32.xlu0 %v873, 64
    %v877 = vpop.permute.xlu0 %876
    %v879 = vmul.f32 %v872, %v877
    %881 = vrot.lane.b32.xlu0 %v879, 32
    %v882 = vpop.permute.xlu0 %881
    %v884 = vadd.f32 %v874, %v882
    %v885 = vtanh.pop %v884
    %887 = vrot.lane.b32.xlu0 %v885, 64
    %v888 = vpop.permute.xlu0 %887
    %v890 = vmul.f32 %v872, %v888
    %892 = vrot.lane.b32.xlu0 %v866, 32
    %v893 = vpop.permute.xlu0 %892
    %896 = vrot.lane.b32.xlu0 %v890, 64
    %v897 = vpop.permute.xlu0 %896
    %v899 = vsel %vm69, %v893, %v897
    %v900 = vpack.c.bf16 %v899, %v899
    %v902 = vsel %vm208, %v900, 0
    %904 = vmatprep.subr.bf16.mxu0 %v193
    %905 = vmatpush1.bf16.msra.mxu0 %v192
    %906 = vmatprep.subr.bf16.mxu0 %v195
    %907 = vmatpush1.bf16.msra.mxu0 %v194
    %908 = vmatprep.subr.bf16.mxu0 %v197
    %909 = vmatpush1.bf16.msra.mxu0 %v196
    %910 = vmatprep.subr.bf16.mxu0 %v199
    %911 = vmatpush1.bf16.msra.mxu0 %v198
    %912 = vmatprep.subr.bf16.mxu0 0
    %913 = vmatpush1.bf16.msra.mxu0 0
    %914 = vmatprep.subr.bf16.mxu0 0
    %915 = vmatpush1.bf16.msra.mxu0 0
    %916 = vmatprep.subr.bf16.mxu0 0
    %917 = vmatpush1.bf16.msra.mxu0 0
    %918 = vmatprep.subr.bf16.mxu0 0
    %919 = vmatpush1.bf16.msra.mxu0 0
    %920 = vmatprep.subr.bf16.mxu0 0
    %921 = vmatpush1.bf16.msra.mxu0 0
    %922 = vmatprep.subr.bf16.mxu0 0
    %923 = vmatpush1.bf16.msra.mxu0 0
    %924 = vmatprep.subr.bf16.mxu0 0
    %925 = vmatpush1.bf16.msra.mxu0 0
    %926 = vmatprep.subr.bf16.mxu0 0
    %927 = vmatpush1.bf16.msra.mxu0 0
    %928 = vmatprep.subr.bf16.mxu0 0
    %929 = vmatpush1.bf16.msra.mxu0 0
    %930 = vmatprep.subr.bf16.mxu0 0
    %931 = vmatpush1.bf16.msra.mxu0 0
    %932 = vmatprep.subr.bf16.mxu0 0
    %933 = vmatpush1.bf16.msra.mxu0 0
    %934 = vmatprep.subr.bf16.mxu0 0
    %935 = vmatpush1.bf16.msra.mxu0 0
    %936 = vmatprep.mubr.bf16.mxu0 0
    %937 = vmatmul.mubr.bf16.gmra.mrb[0].mxu0 %v902
    %v938 = vpop.f32.mrb[0].mxu0
    %v939 = vadd.f32 %v161, %v938
    %v940 = vpop.f32.mrb[0].mxu0
    %v941 = vadd.f32 %v165, %v940
    %v942 = vpop.f32.mrb[0].mxu0
    %v943 = vpop.f32.mrb[0].mxu0
    %944 = vdwg.mxu0
    %v945 = vadd.f32 %v939, %v144
    %v946 = vxor.u32 %v945, 2147483648
    %v947 = vmul.f32 %v946, 1.442695
    %v948 = vpow.pop %v947
    %v949 = vadd.f32 %v948, 1.0
    %v950 = vrcp.pop %v949
    %v951 = vmul.f32 1.0, %v950
    %v952 = vtanh.pop %v945
    %v953 = vmul.f32 %v951, %v860
    %955 = vrot.lane.b32.xlu0 %v952, 64
    %v956 = vpop.permute.xlu0 %955
    %v958 = vmul.f32 %v951, %v956
    %960 = vrot.lane.b32.xlu0 %v958, 32
    %v961 = vpop.permute.xlu0 %960
    %v963 = vadd.f32 %v953, %v961
    %v964 = vtanh.pop %v963
    %966 = vrot.lane.b32.xlu0 %v964, 64
    %v967 = vpop.permute.xlu0 %966
    %v969 = vmul.f32 %v951, %v967
    %v970 = vxor.u32 %v941, 2147483648
    %v971 = vmul.f32 %v970, 1.442695
    %v972 = vpow.pop %v971
    %v973 = vadd.f32 %v972, 1.0
    %v974 = vrcp.pop %v973
    %v975 = vmul.f32 1.0, %v974
    %v976 = vtanh.pop %v941
    %v977 = vmul.f32 %v975, %v884
    %979 = vrot.lane.b32.xlu0 %v976, 64
    %v980 = vpop.permute.xlu0 %979
    %v982 = vmul.f32 %v975, %v980
    %984 = vrot.lane.b32.xlu0 %v982, 32
    %v985 = vpop.permute.xlu0 %984
    %v987 = vadd.f32 %v977, %v985
    %v988 = vtanh.pop %v987
    %990 = vrot.lane.b32.xlu0 %v988, 64
    %v991 = vpop.permute.xlu0 %990
    %v993 = vmul.f32 %v975, %v991
    %995 = vrot.lane.b32.xlu0 %v969, 32
    %v996 = vpop.permute.xlu0 %995
    %999 = vrot.lane.b32.xlu0 %v993, 64
    %v1000 = vpop.permute.xlu0 %999
    %v1002 = vsel %vm69, %v996, %v1000
    %v1003 = vpack.c.bf16 %v1002, %v1002
    %v1005 = vsel %vm208, %v1003, 0
    %1007 = vmatprep.subr.bf16.mxu0 %v193
    %1008 = vmatpush1.bf16.msra.mxu0 %v192
    %1009 = vmatprep.subr.bf16.mxu0 %v195
    %1010 = vmatpush1.bf16.msra.mxu0 %v194
    %1011 = vmatprep.subr.bf16.mxu0 %v197
    %1012 = vmatpush1.bf16.msra.mxu0 %v196
    %1013 = vmatprep.subr.bf16.mxu0 %v199
    %1014 = vmatpush1.bf16.msra.mxu0 %v198
    %1015 = vmatprep.subr.bf16.mxu0 0
    %1016 = vmatpush1.bf16.msra.mxu0 0
    %1017 = vmatprep.subr.bf16.mxu0 0
    %1018 = vmatpush1.bf16.msra.mxu0 0
    %1019 = vmatprep.subr.bf16.mxu0 0
    %1020 = vmatpush1.bf16.msra.mxu0 0
    %1021 = vmatprep.subr.bf16.mxu0 0
    %1022 = vmatpush1.bf16.msra.mxu0 0
    %1023 = vmatprep.subr.bf16.mxu0 0
    %1024 = vmatpush1.bf16.msra.mxu0 0
    %1025 = vmatprep.subr.bf16.mxu0 0
    %1026 = vmatpush1.bf16.msra.mxu0 0
    %1027 = vmatprep.subr.bf16.mxu0 0
    %1028 = vmatpush1.bf16.msra.mxu0 0
    %1029 = vmatprep.subr.bf16.mxu0 0
    %1030 = vmatpush1.bf16.msra.mxu0 0
    %1031 = vmatprep.subr.bf16.mxu0 0
    %1032 = vmatpush1.bf16.msra.mxu0 0
    %1033 = vmatprep.subr.bf16.mxu0 0
    %1034 = vmatpush1.bf16.msra.mxu0 0
    %1035 = vmatprep.subr.bf16.mxu0 0
    %1036 = vmatpush1.bf16.msra.mxu0 0
    %1037 = vmatprep.subr.bf16.mxu0 0
    %1038 = vmatpush1.bf16.msra.mxu0 0
    %1039 = vmatprep.mubr.bf16.mxu0 0
    %1040 = vmatmul.mubr.bf16.gmra.mrb[0].mxu0 %v1005
    %v1041 = vpop.f32.mrb[0].mxu0
    %v1042 = vpop.f32.mrb[0].mxu0
    %v1043 = vadd.f32 %v165, %v1042
    %v1044 = vpop.f32.mrb[0].mxu0
    %v1045 = vpop.f32.mrb[0].mxu0
    %1046 = vdwg.mxu0
    %v1047 = vxor.u32 %v1043, 2147483648
    %v1048 = vmul.f32 %v1047, 1.442695
    %v1049 = vpow.pop %v1048
    %v1050 = vadd.f32 %v1049, 1.0
    %v1051 = vrcp.pop %v1050
    %v1052 = vmul.f32 1.0, %v1051
    %v1053 = vtanh.pop %v1043
    %v1054 = vmul.f32 %v1052, %v987
    %1056 = vrot.lane.b32.xlu0 %v1053, 64
    %v1057 = vpop.permute.xlu0 %1056
    %v1059 = vmul.f32 %v1052, %v1057
    %1061 = vrot.lane.b32.xlu0 %v1059, 32
    %v1062 = vpop.permute.xlu0 %1061
    %v1064 = vadd.f32 %v1054, %v1062
    %v1065 = vtanh.pop %v1064
    %1067 = vrot.lane.b32.xlu0 %v1065, 64
    %v1068 = vpop.permute.xlu0 %1067
    %v1070 = vmul.f32 %v1052, %v1068
    %v1071 = vpack.c.bf16 %v1070, %v1070
    %v1072 = vld [vmem:[%s4] sm:$0xf]
    %v1073 = vld [vmem:[%s4 + $0x4] sm:$0xf]
    %v1074 = vld [vmem:[%s4 + $0x8] sm:$0xf]
    %v1075 = vld [vmem:[%s4 + $0xc] sm:$0xf]
    %v1076 = vld [vmem:[%s5] sm:$0x1]
    %v1078 = vlaneseq
    %v1079 = vshrl.u32 %v1078, 7
    %v1080 = vsub.s32 0, %v1079
    %v1081 = vrot.slane %v1076, %v1080
    %1084 = vrot.lane.b32.xlu0 %v1071, 32
    %v1085 = vpop.permute.xlu0 %1084
    %v1090 = vunpack.c.l.b16 %v1072
    %v1091 = vunpack.c.l.b16 %v1073
    %v1092 = vunpack.c.l.b16 %v1074
    %v1093 = vunpack.c.l.b16 %v1075
    %v1094 = vpack.c.b16 %v1091, %v1090
    %v1095 = vpack.c.b16 %v1093, %v1092
    %v1099 = vsel %vm69, %v1085, 0
    %1101 = vmatprep.subr.bf16.mxu0 0
    %1102 = vmatpush1.bf16.msra.mxu0 %v1094
    %1103 = vmatprep.subr.bf16.mxu0 0
    %1104 = vmatpush1.bf16.msra.mxu0 %v1095
    %1105 = vmatprep.subr.bf16.mxu0 0
    %1106 = vmatpush1.bf16.msra.mxu0 0
    %1107 = vmatprep.subr.bf16.mxu0 0
    %1108 = vmatpush1.bf16.msra.mxu0 0
    %1109 = vmatprep.subr.bf16.mxu0 0
    %1110 = vmatpush1.bf16.msra.mxu0 0
    %1111 = vmatprep.subr.bf16.mxu0 0
    %1112 = vmatpush1.bf16.msra.mxu0 0
    %1113 = vmatprep.subr.bf16.mxu0 0
    %1114 = vmatpush1.bf16.msra.mxu0 0
    %1115 = vmatprep.subr.bf16.mxu0 0
    %1116 = vmatpush1.bf16.msra.mxu0 0
    %1117 = vmatprep.subr.bf16.mxu0 0
    %1118 = vmatpush1.bf16.msra.mxu0 0
    %1119 = vmatprep.subr.bf16.mxu0 0
    %1120 = vmatpush1.bf16.msra.mxu0 0
    %1121 = vmatprep.subr.bf16.mxu0 0
    %1122 = vmatpush1.bf16.msra.mxu0 0
    %1123 = vmatprep.subr.bf16.mxu0 0
    %1124 = vmatpush1.bf16.msra.mxu0 0
    %1125 = vmatprep.subr.bf16.mxu0 0
    %1126 = vmatpush1.bf16.msra.mxu0 0
    %1127 = vmatprep.subr.bf16.mxu0 0
    %1128 = vmatpush1.bf16.msra.mxu0 0
    %1129 = vmatprep.subr.bf16.mxu0 0
    %1130 = vmatpush1.bf16.msra.mxu0 0
    %1131 = vmatprep.subr.bf16.mxu0 0
    %1132 = vmatpush1.bf16.msra.mxu0 0
    %1133 = vmatprep.mubr.bf16.mxu0 0
    %1134 = vmatmul.mubr.bf16.gmra.mrb[0].mxu0 %v1099
    %v1135 = vpop.f32.mrb[0].mxu0
    %v1136 = vadd.f32 %v1081, %v1135
    %v1137 = vpop.f32.mrb[0].mxu0
    %v1138 = vpop.f32.mrb[0].mxu0
    %v1139 = vpop.f32.mrb[0].mxu0
    %1140 = vdwg.mxu0
    %vm1141 = vcmask 9216
    %1142 = vst.msk [vmem:[#allocation2] sm:$0x3] %vm1141, %v1136
    // Predicated region
    $region26: #{lstm_glove_classifier.1} parent=1 // pred_check
      _
    $region27: #{lstm_glove_classifier.1} parent=1 // pred_check_branch
      %1144 = sbr.rel (0) target = $region29
    $region28: #{lstm_glove_classifier.1} parent=1 // pred_region
      %s1146 = ssub.s32 32, 32
      %1147 = vsyncadd [#allocation3], %s1146
      %s1149 = sshll.u32 [#allocation2], 4
      %s1150 = int_to_ptr.vmem [resolvable:$true] %s1149
      %1152 = dma.vmem_to_hbm [thread:$0]  %s1150, 32, %s6, [#allocation3]
    $region29: #{lstm_glove_classifier.1} parent=1 // pred_fallthru
      _
    // Predicated region
    $region30: #{lstm_glove_classifier.1} parent=1 // pred_check
      _
    $region31: #{lstm_glove_classifier.1} parent=1 // pred_check_branch
      %1154 = sbr.rel (0) target = $region33
    $region32: #{lstm_glove_classifier.1} parent=1 // pred_region
      %1155 = dma.done [#allocation3], 32
    $region33: #{lstm_glove_classifier.1} parent=1 // pred_fallthru
      _
    %1156 = vsyncpa [#allocation3], 1

</llo_original>
